<compile_context>
chip_gen: v5e
topology: v5e:2x2
jax: 0.10.0
libtpu: 0.0.40
codegen_flags: <defaults>
</compile_context>

<pallas_src>
import jax
import jax.numpy as jnp
from jax import lax
from jax.experimental import pallas as pl
from jax.experimental.pallas import tpu as pltpu

EPS = 1e-5  # nn.GroupNorm default eps


def _shuffle_attention_kernel(p_ref, x_ref, o_ref):
    """p_ref: (c_half, 6) f32 columns = [cweight, cbias, sweight, sbias, gn_w, gn_b]
       x_ref: (tb_b, 2, tb_gg, 2, c_half, hw)   axes = (batch, bit, gg, branch, jc, s)
       o_ref: (tb_b, tb_gg, 2, c_half, 2*hw)    axes = (batch, gg, branch, jc, bit*hw+s)"""
    hw = x_ref.shape[-1]
    p = p_ref[...].astype(jnp.float32)
    cw, cb = p[:, 0:1], p[:, 1:2]
    sw, sb = p[:, 2:3], p[:, 3:4]
    gw, gb = p[:, 4:5], p[:, 5:6]

    for bit in range(2):  # static python loop, unrolled (2 iterations)
        # ---- channel-attention branch (branch axis == 0) --------------------
        x0 = x_ref[:, bit, :, 0, :, :].astype(jnp.float32)   # (tb_b, tb_gg, c_half, hw)
        pooled = jnp.mean(x0, axis=-1, keepdims=True)         # adaptive avg-pool over hw
        y0 = x0 * jax.nn.sigmoid(cw * pooled + cb)

        # ---- spatial branch: GroupNorm(groups == channels) -> per-channel norm
        x1 = x_ref[:, bit, :, 1, :, :].astype(jnp.float32)
        mu = jnp.mean(x1, axis=-1, keepdims=True)
        var = jnp.mean(jnp.square(x1 - mu), axis=-1, keepdims=True)
        gn = (x1 - mu) * lax.rsqrt(var + EPS) * gw + gb
        y1 = x1 * jax.nn.sigmoid(sw * gn + sb)

        # direct, aligned stores straight into the post-shuffle layout
        o_ref[:, :, 0, :, bit * hw:(bit + 1) * hw] = y0.astype(o_ref.dtype)
        o_ref[:, :, 1, :, bit * hw:(bit + 1) * hw] = y1.astype(o_ref.dtype)


def _largest_divisor_leq(n, cap):
    cap = max(1, min(n, int(cap)))
    for d in range(cap, 0, -1):
        if n % d == 0:
            return d
    return 1


def shuffle_attention(x, cweight, cbias, sweight, sbias, gn_weight, gn_bias, G=8,
                      target_block_bytes=2 * 1024 * 1024):
    """x: (b, c, h, w) NCHW, matching the PyTorch module."""
    b, c, h, w = x.shape
    assert G % 2 == 0, "channel_shuffle(groups=2) folding assumes even G"
    assert c % (2 * G) == 0
    G2 = G // 2
    c_per_g = c // G
    c_half = c_per_g // 2
    hw = h * w
    itemsize = jnp.dtype(x.dtype).itemsize

    # Pure view of the input: (batch, bit, gg, branch, jc, s).
    # group g = bit*G2 + gg; within-group channel = branch*c_half + jc.
    xv = x.reshape(b, 2, G2, 2, c_half, hw)

    # Per-channel params kept in float32 (stats precision): (c_half, 6).
    params = jnp.stack(
        [cweight, cbias, sweight, sbias, gn_weight, gn_bias], axis=-1
    ).astype(jnp.float32)

    # ---- block sizing: batch slices per grid step up to ~target_block_bytes --
    per_gg_bytes = 2 * c_per_g * hw * itemsize      # both "bit" groups of one gg
    per_batch_bytes = G2 * per_gg_bytes             # = c * hw * itemsize
    if per_batch_bytes <= target_block_bytes:
        tb_gg = G2
        tb_b = _largest_divisor_leq(b, target_block_bytes // per_batch_bytes)
    else:
        tb_b = 1
        tb_gg = _largest_divisor_leq(G2, target_block_bytes // per_gg_bytes)
    # keep >= 2 grid steps when possible (v7x has two TensorCores)
    if (b // tb_b) * (G2 // tb_gg) < 2:
        if b > 1:
            tb_b = _largest_divisor_leq(b, b // 2)
        elif G2 > 1:
            tb_gg = _largest_divisor_leq(G2, G2 // 2)
    grid = (b // tb_b, G2 // tb_gg)

    cost = pl.CostEstimate(
        flops=10 * x.size,
        transcendentals=x.size,
        bytes_accessed=2 * x.size * itemsize + params.size * 4,
    )

    # Output layout: (b, gg, branch, jc, bit*hw + s).  Row-major flatten of the
    # channel axes (gg, branch, jc, bit) gives 2*(gg*c_per_g + branch*c_half + jc) + bit,
    # which is exactly channel_shuffle(cat([x_channel, x_spatial]), 2).
    out5 = pl.pallas_call(
        _shuffle_attention_kernel,
        out_shape=jax.ShapeDtypeStruct((b, G2, 2, c_half, 2 * hw), x.dtype),
        grid_spec=pltpu.PrefetchScalarGridSpec(
            num_scalar_prefetch=0,
            grid=grid,
            in_specs=[
                pl.BlockSpec((c_half, 6), lambda ib, ig: (0, 0)),               # params
                pl.BlockSpec((tb_b, 2, tb_gg, 2, c_half, hw),                    # x view
                             lambda ib, ig: (ib, 0, ig, 0, 0, 0)),
            ],
            out_specs=pl.BlockSpec((tb_b, tb_gg, 2, c_half, 2 * hw),
                                   lambda ib, ig: (ib, ig, 0, 0, 0)),
        ),
        compiler_params=pltpu.CompilerParams(
            dimension_semantics=("parallel", "parallel")),
        cost_estimate=cost,
    )(params, xv)

    # Pure reshape (no transpose, no extra HBM pass): already channel-shuffled.
    return out5.reshape(b, c, h, w)


def shuffle_attention_ref(x, cweight, cbias, sweight, sbias, gn_weight, gn_bias, G=8):
    """Pure-JAX reference mirroring the PyTorch forward exactly."""
    b, c, h, w = x.shape
    xg = x.reshape(b * G, c // G, h, w)
    x0, x1 = jnp.split(xg, 2, axis=1)

    cw = cweight[None, :, None, None]
    cb = cbias[None, :, None, None]
    sw = sweight[None, :, None, None]
    sb = sbias[None, :, None, None]
    gw = gn_weight[None, :, None, None]
    gb = gn_bias[None, :, None, None]

    pooled = jnp.mean(x0, axis=(2, 3), keepdims=True)
    x_channel = x0 * jax.nn.sigmoid(cw * pooled + cb)

    mu = jnp.mean(x1, axis=(2, 3), keepdims=True)
    var = jnp.mean(jnp.square(x1 - mu), axis=(2, 3), keepdims=True)
    gn = (x1 - mu) / jnp.sqrt(var + EPS) * gw + gb
    x_spatial = x1 * jax.nn.sigmoid(sw * gn + sb)

    out = jnp.concatenate([x_channel, x_spatial], axis=1).reshape(b, c, h, w)
    out = out.reshape(b, 2, c // 2, h, w).transpose(0, 2, 1, 3, 4).reshape(b, c, h, w)
    return out


if __name__ == "__main__":
    # Small shapes consistent with the module: channel must be divisible by 2*G.
    B, C, H, W = 2, 64, 16, 16
    G = 8
    C_HALF = C // (2 * G)  # = 4 ; param shapes per __init__: (1, C//(2G), 1, 1)

    key = jax.random.PRNGKey(0)
    kx, kc, kcb, ks, ksb, kgw, kgb = jax.random.split(key, 7)
    x = jax.random.normal(kx, (B, C, H, W), dtype=jnp.float32)

    # Deterministic parameter init (module init is zeros/ones; randomize here so
    # the full compute path is exercised non-degenerately).
    cweight = 0.5 * jax.random.normal(kc, (C_HALF,), dtype=jnp.float32)
    cbias = 1.0 + 0.1 * jax.random.normal(kcb, (C_HALF,), dtype=jnp.float32)
    sweight = 0.5 * jax.random.normal(ks, (C_HALF,), dtype=jnp.float32)
    sbias = 1.0 + 0.1 * jax.random.normal(ksb, (C_HALF,), dtype=jnp.float32)
    gn_weight = 1.0 + 0.1 * jax.random.normal(kgw, (C_HALF,), dtype=jnp.float32)
    gn_bias = 0.1 * jax.random.normal(kgb, (C_HALF,), dtype=jnp.float32)

    out = shuffle_attention(x, cweight, cbias, sweight, sbias, gn_weight, gn_bias, G=G)
    out = jax.block_until_ready(out)

    ref = shuffle_attention_ref(x, cweight, cbias, sweight, sbias, gn_weight, gn_bias, G=G)
    assert out.shape == (B, C, H, W)
    assert jnp.allclose(out, ref, rtol=1e-5, atol=1e-5), "mismatch vs reference"
    print("KERNEL_OK")
</pallas_src>

<mosaic_0001>
module attributes {stable_mosaic.version = 11 : i64} {
  func.func @_shuffle_attention_kernel(%arg0: i32, %arg1: i32, %arg2: memref<4x6xf32, #tpu.memory_space<vmem>>, %arg3: memref<1x2x4x2x4x256xf32, #tpu.memory_space<vmem>>, %arg4: memref<1x4x2x4x512xf32, #tpu.memory_space<vmem>>) attributes {dimension_semantics = [#tpu.dimension_semantics<parallel>, #tpu.dimension_semantics<parallel>], iteration_bounds = array<i64: 2, 1>, scalar_prefetch = 0 : i64, scratch_operands = 0 : i64, tpu.core_type = #tpu.core_type<tc>, window_params = [{pipeline_mode = #tpu.pipeline_mode<synchronous>, transform_indices = @transform_0, window_bounds = array<i64: 4, 6>}, {transform_indices = @transform_1, window_bounds = array<i64: 1, 2, 4, 2, 4, 256>}, {transform_indices = @transform_2, window_bounds = array<i64: 1, 4, 2, 4, 512>}]} {
    %c0 = arith.constant 0 : index
    %c0_0 = arith.constant 0 : index
    %0 = vector.load %arg2[%c0, %c0_0] : memref<4x6xf32, #tpu.memory_space<vmem>>, vector<4x6xf32>
    %1 = vector.extract_strided_slice %0 {offsets = [0, 0], sizes = [4, 1], strides = [1, 1]} : vector<4x6xf32> to vector<4x1xf32>
    %2 = vector.extract_strided_slice %0 {offsets = [0, 1], sizes = [4, 1], strides = [1, 1]} : vector<4x6xf32> to vector<4x1xf32>
    %3 = vector.extract_strided_slice %0 {offsets = [0, 2], sizes = [4, 1], strides = [1, 1]} : vector<4x6xf32> to vector<4x1xf32>
    %4 = vector.extract_strided_slice %0 {offsets = [0, 3], sizes = [4, 1], strides = [1, 1]} : vector<4x6xf32> to vector<4x1xf32>
    %5 = vector.extract_strided_slice %0 {offsets = [0, 4], sizes = [4, 1], strides = [1, 1]} : vector<4x6xf32> to vector<4x1xf32>
    %6 = vector.extract_strided_slice %0 {offsets = [0, 5], sizes = [4, 1], strides = [1, 1]} : vector<4x6xf32> to vector<4x1xf32>
    %c0_1 = arith.constant 0 : index
    %c0_2 = arith.constant 0 : index
    %c0_3 = arith.constant 0 : index
    %c0_4 = arith.constant 0 : index
    %c0_5 = arith.constant 0 : index
    %c0_6 = arith.constant 0 : index
    %7 = vector.load %arg3[%c0_1, %c0_2, %c0_3, %c0_4, %c0_5, %c0_6] : memref<1x2x4x2x4x256xf32, #tpu.memory_space<vmem>>, vector<1x1x4x1x4x256xf32>
    %8 = vector.shape_cast %7 : vector<1x1x4x1x4x256xf32> to vector<1x4x4x256xf32>
    %cst = arith.constant dense<0.000000e+00> : vector<1x4x4xf32>
    %9 = vector.multi_reduction <add>, %8, %cst [3] : vector<1x4x4x256xf32> to vector<1x4x4xf32>
    %10 = vector.shape_cast %9 : vector<1x4x4xf32> to vector<1x4x4x1xf32>
    %cst_7 = arith.constant 2.560000e+02 : f32
    %11 = vector.broadcast %cst_7 : f32 to vector<1x4x4x1xf32>
    %12 = arith.divf %10, %11 : vector<1x4x4x1xf32>
    %13 = vector.shape_cast %1 : vector<4x1xf32> to vector<1x1x4x1xf32>
    %14 = vector.broadcast %13 : vector<1x1x4x1xf32> to vector<1x4x4x1xf32>
    %15 = arith.mulf %14, %12 : vector<1x4x4x1xf32>
    %16 = vector.shape_cast %2 : vector<4x1xf32> to vector<1x1x4x1xf32>
    %17 = vector.broadcast %16 : vector<1x1x4x1xf32> to vector<1x4x4x1xf32>
    %18 = arith.addf %15, %17 : vector<1x4x4x1xf32>
    %19 = arith.negf %18 : vector<1x4x4x1xf32>
    %20 = math.exp %19 : vector<1x4x4x1xf32>
    %cst_8 = arith.constant 1.000000e+00 : f32
    %21 = vector.broadcast %cst_8 : f32 to vector<1x4x4x1xf32>
    %22 = arith.addf %21, %20 : vector<1x4x4x1xf32>
    %23 = arith.divf %21, %22 : vector<1x4x4x1xf32>
    %24 = vector.broadcast %23 : vector<1x4x4x1xf32> to vector<1x4x4x256xf32>
    %25 = arith.mulf %8, %24 : vector<1x4x4x256xf32>
    %c0_9 = arith.constant 0 : index
    %c0_10 = arith.constant 0 : index
    %c0_11 = arith.constant 0 : index
    %c1 = arith.constant 1 : index
    %c0_12 = arith.constant 0 : index
    %c0_13 = arith.constant 0 : index
    %26 = vector.load %arg3[%c0_9, %c0_10, %c0_11, %c1, %c0_12, %c0_13] : memref<1x2x4x2x4x256xf32, #tpu.memory_space<vmem>>, vector<1x1x4x1x4x256xf32>
    %27 = vector.shape_cast %26 : vector<1x1x4x1x4x256xf32> to vector<1x4x4x256xf32>
    %cst_14 = arith.constant dense<0.000000e+00> : vector<1x4x4xf32>
    %28 = vector.multi_reduction <add>, %27, %cst_14 [3] : vector<1x4x4x256xf32> to vector<1x4x4xf32>
    %29 = vector.shape_cast %28 : vector<1x4x4xf32> to vector<1x4x4x1xf32>
    %cst_15 = arith.constant 2.560000e+02 : f32
    %30 = vector.broadcast %cst_15 : f32 to vector<1x4x4x1xf32>
    %31 = arith.divf %29, %30 : vector<1x4x4x1xf32>
    %32 = vector.broadcast %31 : vector<1x4x4x1xf32> to vector<1x4x4x256xf32>
    %33 = arith.subf %27, %32 : vector<1x4x4x256xf32>
    %34 = arith.mulf %33, %33 : vector<1x4x4x256xf32>
    %cst_16 = arith.constant dense<0.000000e+00> : vector<1x4x4xf32>
    %35 = vector.multi_reduction <add>, %34, %cst_16 [3] : vector<1x4x4x256xf32> to vector<1x4x4xf32>
    %36 = vector.shape_cast %35 : vector<1x4x4xf32> to vector<1x4x4x1xf32>
    %cst_17 = arith.constant 2.560000e+02 : f32
    %37 = vector.broadcast %cst_17 : f32 to vector<1x4x4x1xf32>
    %38 = arith.divf %36, %37 : vector<1x4x4x1xf32>
    %39 = vector.broadcast %31 : vector<1x4x4x1xf32> to vector<1x4x4x256xf32>
    %40 = arith.subf %27, %39 : vector<1x4x4x256xf32>
    %cst_18 = arith.constant 9.99999974E-6 : f32
    %41 = vector.broadcast %cst_18 : f32 to vector<1x4x4x1xf32>
    %42 = arith.addf %38, %41 : vector<1x4x4x1xf32>
    %43 = math.rsqrt %42 : vector<1x4x4x1xf32>
    %44 = vector.broadcast %43 : vector<1x4x4x1xf32> to vector<1x4x4x256xf32>
    %45 = arith.mulf %40, %44 : vector<1x4x4x256xf32>
    %46 = vector.shape_cast %5 : vector<4x1xf32> to vector<1x1x4x1xf32>
    %47 = vector.broadcast %46 : vector<1x1x4x1xf32> to vector<1x4x4x256xf32>
    %48 = arith.mulf %45, %47 : vector<1x4x4x256xf32>
    %49 = vector.shape_cast %6 : vector<4x1xf32> to vector<1x1x4x1xf32>
    %50 = vector.broadcast %49 : vector<1x1x4x1xf32> to vector<1x4x4x256xf32>
    %51 = arith.addf %48, %50 : vector<1x4x4x256xf32>
    %52 = vector.shape_cast %3 : vector<4x1xf32> to vector<1x1x4x1xf32>
    %53 = vector.broadcast %52 : vector<1x1x4x1xf32> to vector<1x4x4x256xf32>
    %54 = arith.mulf %53, %51 : vector<1x4x4x256xf32>
    %55 = vector.shape_cast %4 : vector<4x1xf32> to vector<1x1x4x1xf32>
    %56 = vector.broadcast %55 : vector<1x1x4x1xf32> to vector<1x4x4x256xf32>
    %57 = arith.addf %54, %56 : vector<1x4x4x256xf32>
    %58 = arith.negf %57 : vector<1x4x4x256xf32>
    %59 = math.exp %58 : vector<1x4x4x256xf32>
    %cst_19 = arith.constant 1.000000e+00 : f32
    %60 = vector.broadcast %cst_19 : f32 to vector<1x4x4x256xf32>
    %61 = arith.addf %60, %59 : vector<1x4x4x256xf32>
    %62 = arith.divf %60, %61 : vector<1x4x4x256xf32>
    %63 = arith.mulf %27, %62 : vector<1x4x4x256xf32>
    %c0_20 = arith.constant 0 : index
    %c0_21 = arith.constant 0 : index
    %c0_22 = arith.constant 0 : index
    %c0_23 = arith.constant 0 : index
    %c0_24 = arith.constant 0 : index
    %64 = vector.load %arg4[%c0_20, %c0_21, %c0_22, %c0_23, %c0_24] : memref<1x4x2x4x512xf32, #tpu.memory_space<vmem>>, vector<1x4x1x4x256xf32>
    %65 = vector.shape_cast %64 : vector<1x4x1x4x256xf32> to vector<1x4x4x256xf32>
    %66 = vector.shape_cast %25 : vector<1x4x4x256xf32> to vector<1x4x1x4x256xf32>
    tpu.vector_store %arg4[%c0_20, %c0_21, %c0_22, %c0_23, %c0_24], %66 {strides = array<i32>} : memref<1x4x2x4x512xf32, #tpu.memory_space<vmem>>, vector<1x4x1x4x256xf32>,
    %c0_25 = arith.constant 0 : index
    %c0_26 = arith.constant 0 : index
    %c1_27 = arith.constant 1 : index
    %c0_28 = arith.constant 0 : index
    %c0_29 = arith.constant 0 : index
    %67 = vector.load %arg4[%c0_25, %c0_26, %c1_27, %c0_28, %c0_29] : memref<1x4x2x4x512xf32, #tpu.memory_space<vmem>>, vector<1x4x1x4x256xf32>
    %68 = vector.shape_cast %67 : vector<1x4x1x4x256xf32> to vector<1x4x4x256xf32>
    %69 = vector.shape_cast %63 : vector<1x4x4x256xf32> to vector<1x4x1x4x256xf32>
    tpu.vector_store %arg4[%c0_25, %c0_26, %c1_27, %c0_28, %c0_29], %69 {strides = array<i32>} : memref<1x4x2x4x512xf32, #tpu.memory_space<vmem>>, vector<1x4x1x4x256xf32>,
    %c0_30 = arith.constant 0 : index
    %c1_31 = arith.constant 1 : index
    %c0_32 = arith.constant 0 : index
    %c0_33 = arith.constant 0 : index
    %c0_34 = arith.constant 0 : index
    %c0_35 = arith.constant 0 : index
    %70 = vector.load %arg3[%c0_30, %c1_31, %c0_32, %c0_33, %c0_34, %c0_35] : memref<1x2x4x2x4x256xf32, #tpu.memory_space<vmem>>, vector<1x1x4x1x4x256xf32>
    %71 = vector.shape_cast %70 : vector<1x1x4x1x4x256xf32> to vector<1x4x4x256xf32>
    %cst_36 = arith.constant dense<0.000000e+00> : vector<1x4x4xf32>
    %72 = vector.multi_reduction <add>, %71, %cst_36 [3] : vector<1x4x4x256xf32> to vector<1x4x4xf32>
    %73 = vector.shape_cast %72 : vector<1x4x4xf32> to vector<1x4x4x1xf32>
    %cst_37 = arith.constant 2.560000e+02 : f32
    %74 = vector.broadcast %cst_37 : f32 to vector<1x4x4x1xf32>
    %75 = arith.divf %73, %74 : vector<1x4x4x1xf32>
    %76 = vector.shape_cast %1 : vector<4x1xf32> to vector<1x1x4x1xf32>
    %77 = vector.broadcast %76 : vector<1x1x4x1xf32> to vector<1x4x4x1xf32>
    %78 = arith.mulf %77, %75 : vector<1x4x4x1xf32>
    %79 = vector.shape_cast %2 : vector<4x1xf32> to vector<1x1x4x1xf32>
    %80 = vector.broadcast %79 : vector<1x1x4x1xf32> to vector<1x4x4x1xf32>
    %81 = arith.addf %78, %80 : vector<1x4x4x1xf32>
    %82 = arith.negf %81 : vector<1x4x4x1xf32>
    %83 = math.exp %82 : vector<1x4x4x1xf32>
    %cst_38 = arith.constant 1.000000e+00 : f32
    %84 = vector.broadcast %cst_38 : f32 to vector<1x4x4x1xf32>
    %85 = arith.addf %84, %83 : vector<1x4x4x1xf32>
    %86 = arith.divf %84, %85 : vector<1x4x4x1xf32>
    %87 = vector.broadcast %86 : vector<1x4x4x1xf32> to vector<1x4x4x256xf32>
    %88 = arith.mulf %71, %87 : vector<1x4x4x256xf32>
    %c0_39 = arith.constant 0 : index
    %c1_40 = arith.constant 1 : index
    %c0_41 = arith.constant 0 : index
    %c1_42 = arith.constant 1 : index
    %c0_43 = arith.constant 0 : index
    %c0_44 = arith.constant 0 : index
    %89 = vector.load %arg3[%c0_39, %c1_40, %c0_41, %c1_42, %c0_43, %c0_44] : memref<1x2x4x2x4x256xf32, #tpu.memory_space<vmem>>, vector<1x1x4x1x4x256xf32>
    %90 = vector.shape_cast %89 : vector<1x1x4x1x4x256xf32> to vector<1x4x4x256xf32>
    %cst_45 = arith.constant dense<0.000000e+00> : vector<1x4x4xf32>
    %91 = vector.multi_reduction <add>, %90, %cst_45 [3] : vector<1x4x4x256xf32> to vector<1x4x4xf32>
    %92 = vector.shape_cast %91 : vector<1x4x4xf32> to vector<1x4x4x1xf32>
    %cst_46 = arith.constant 2.560000e+02 : f32
    %93 = vector.broadcast %cst_46 : f32 to vector<1x4x4x1xf32>
    %94 = arith.divf %92, %93 : vector<1x4x4x1xf32>
    %95 = vector.broadcast %94 : vector<1x4x4x1xf32> to vector<1x4x4x256xf32>
    %96 = arith.subf %90, %95 : vector<1x4x4x256xf32>
    %97 = arith.mulf %96, %96 : vector<1x4x4x256xf32>
    %cst_47 = arith.constant dense<0.000000e+00> : vector<1x4x4xf32>
    %98 = vector.multi_reduction <add>, %97, %cst_47 [3] : vector<1x4x4x256xf32> to vector<1x4x4xf32>
    %99 = vector.shape_cast %98 : vector<1x4x4xf32> to vector<1x4x4x1xf32>
    %cst_48 = arith.constant 2.560000e+02 : f32
    %100 = vector.broadcast %cst_48 : f32 to vector<1x4x4x1xf32>
    %101 = arith.divf %99, %100 : vector<1x4x4x1xf32>
    %102 = vector.broadcast %94 : vector<1x4x4x1xf32> to vector<1x4x4x256xf32>
    %103 = arith.subf %90, %102 : vector<1x4x4x256xf32>
    %cst_49 = arith.constant 9.99999974E-6 : f32
    %104 = vector.broadcast %cst_49 : f32 to vector<1x4x4x1xf32>
    %105 = arith.addf %101, %104 : vector<1x4x4x1xf32>
    %106 = math.rsqrt %105 : vector<1x4x4x1xf32>
    %107 = vector.broadcast %106 : vector<1x4x4x1xf32> to vector<1x4x4x256xf32>
    %108 = arith.mulf %103, %107 : vector<1x4x4x256xf32>
    %109 = vector.shape_cast %5 : vector<4x1xf32> to vector<1x1x4x1xf32>
    %110 = vector.broadcast %109 : vector<1x1x4x1xf32> to vector<1x4x4x256xf32>
    %111 = arith.mulf %108, %110 : vector<1x4x4x256xf32>
    %112 = vector.shape_cast %6 : vector<4x1xf32> to vector<1x1x4x1xf32>
    %113 = vector.broadcast %112 : vector<1x1x4x1xf32> to vector<1x4x4x256xf32>
    %114 = arith.addf %111, %113 : vector<1x4x4x256xf32>
    %115 = vector.shape_cast %3 : vector<4x1xf32> to vector<1x1x4x1xf32>
    %116 = vector.broadcast %115 : vector<1x1x4x1xf32> to vector<1x4x4x256xf32>
    %117 = arith.mulf %116, %114 : vector<1x4x4x256xf32>
    %118 = vector.shape_cast %4 : vector<4x1xf32> to vector<1x1x4x1xf32>
    %119 = vector.broadcast %118 : vector<1x1x4x1xf32> to vector<1x4x4x256xf32>
    %120 = arith.addf %117, %119 : vector<1x4x4x256xf32>
    %121 = arith.negf %120 : vector<1x4x4x256xf32>
    %122 = math.exp %121 : vector<1x4x4x256xf32>
    %cst_50 = arith.constant 1.000000e+00 : f32
    %123 = vector.broadcast %cst_50 : f32 to vector<1x4x4x256xf32>
    %124 = arith.addf %123, %122 : vector<1x4x4x256xf32>
    %125 = arith.divf %123, %124 : vector<1x4x4x256xf32>
    %126 = arith.mulf %90, %125 : vector<1x4x4x256xf32>
    %c0_51 = arith.constant 0 : index
    %c0_52 = arith.constant 0 : index
    %c0_53 = arith.constant 0 : index
    %c0_54 = arith.constant 0 : index
    %c256 = arith.constant 256 : index
    %127 = vector.load %arg4[%c0_51, %c0_52, %c0_53, %c0_54, %c256] : memref<1x4x2x4x512xf32, #tpu.memory_space<vmem>>, vector<1x4x1x4x256xf32>
    %128 = vector.shape_cast %127 : vector<1x4x1x4x256xf32> to vector<1x4x4x256xf32>
    %129 = vector.shape_cast %88 : vector<1x4x4x256xf32> to vector<1x4x1x4x256xf32>
    tpu.vector_store %arg4[%c0_51, %c0_52, %c0_53, %c0_54, %c256], %129 {strides = array<i32>} : memref<1x4x2x4x512xf32, #tpu.memory_space<vmem>>, vector<1x4x1x4x256xf32>,
    %c0_55 = arith.constant 0 : index
    %c0_56 = arith.constant 0 : index
    %c1_57 = arith.constant 1 : index
    %c0_58 = arith.constant 0 : index
    %c256_59 = arith.constant 256 : index
    %130 = vector.load %arg4[%c0_55, %c0_56, %c1_57, %c0_58, %c256_59] : memref<1x4x2x4x512xf32, #tpu.memory_space<vmem>>, vector<1x4x1x4x256xf32>
    %131 = vector.shape_cast %130 : vector<1x4x1x4x256xf32> to vector<1x4x4x256xf32>
    %132 = vector.shape_cast %126 : vector<1x4x4x256xf32> to vector<1x4x1x4x256xf32>
    tpu.vector_store %arg4[%c0_55, %c0_56, %c1_57, %c0_58, %c256_59], %132 {strides = array<i32>} : memref<1x4x2x4x512xf32, #tpu.memory_space<vmem>>, vector<1x4x1x4x256xf32>,
    return
  }
  func.func @transform_0(%arg0: i32, %arg1: i32) -> (i32, i32) {
    %c0_i32 = arith.constant 0 : i32
    %c0_i32_0 = arith.constant 0 : i32
    %c0_i32_1 = arith.constant 0 : i32
    return %c0_i32, %c0_i32_0 : i32, i32
  }
  func.func @transform_1(%arg0: i32, %arg1: i32) -> (i32, i32, i32, i32, i32, i32) {
    %c0_i32 = arith.constant 0 : i32
    %c0_i32_0 = arith.constant 0 : i32
    %c0_i32_1 = arith.constant 0 : i32
    %c0_i32_2 = arith.constant 0 : i32
    %c0_i32_3 = arith.constant 0 : i32
    return %arg0, %c0_i32, %arg1, %c0_i32_0, %c0_i32_1, %c0_i32_2 : i32, i32, i32, i32, i32, i32
  }
  func.func @transform_2(%arg0: i32, %arg1: i32) -> (i32, i32, i32, i32, i32) {
    %c0_i32 = arith.constant 0 : i32
    %c0_i32_0 = arith.constant 0 : i32
    %c0_i32_1 = arith.constant 0 : i32
    %c0_i32_2 = arith.constant 0 : i32
    return %arg0, %arg1, %c0_i32, %c0_i32_0, %c0_i32_1 : i32, i32, i32, i32, i32
  }
}

</mosaic_0001>

<llo_original>
// kernel: tpu_custom_call.1
$region0: #{tpu_custom_call.1}
  #allocation0 [shape = 'u32[]', space=smem, size = 0x4, offset = 0x4, fixed_abs, tag = 'smem constant byte address 0x4 - core index']
  #allocation1 [shape = 'u32[72,128]{1,0:T(1,128)}', space=vmem, size = 0x9000, scoped, tag = 'internal scratch']
  %s0 = inlined_call_operand.hbm [shape: f32[4,6], index: 0, kind: input, shape index: {}]
  %s1 = inlined_call_operand.hbm [shape: f32[2,2,4,2,4,256], index: 1, kind: input, shape index: {}]
  %s2 = inlined_call_operand.hbm [shape: f32[2,4,2,4,512], index: 2, kind: output, shape index: {}]
  %s3 = sld [smem:[#allocation0]]
  $region49: #{tpu_custom_call.1} parent=0
    _
  %s5 = ssub.s32 1, %s3
  %s6 = scalar_select 0, %s5, %s3
  $region1: #{tpu_custom_call.1} parent=0
    #allocation2 [shape = 'u8[2048]{0}', space=vmem, size = 0x800, scoped, tag = 'input window, operand 0, single buffered']
    #allocation3 [shape = 's32[2]{0}', space=sflag, size = 0x8, scoped, tag = 'scoped memory for tpu_custom_call.1']
    #allocation4 [shape = 's32[2]{0}', space=sflag, size = 0x8, scoped, tag = 'scoped memory for tpu_custom_call.1']
    #allocation5 [shape = 'u8[131072]{0}', space=vmem, size = 0x20000, scoped, tag = 'input window, operand 1']
    #allocation6 [shape = 's32[2]{0}', space=sflag, size = 0x8, scoped, tag = 'scoped memory for tpu_custom_call.1']
    #allocation7 [shape = 'u8[131072]{0}', space=vmem, size = 0x20000, scoped, tag = 'output window, operand 0']
    %7 = vsyncpa [#allocation3], 0
    %8 = vsyncpa [#allocation6], 0
    %s9 = scalar_lea.sflag [#allocation6], 1
    %10 = vsyncpa %s9, 0
    %11 = vsyncpa [#allocation4], 0
    %s12 = scalar_lea.sflag [#allocation4], 1
    %13 = vsyncpa %s12, 0
    loop: start=0, step=1, limit=4
    $region2: #{tpu_custom_call.1} parent=1 // loop_pre_header
      _
    $region3: #{tpu_custom_call.1} parent=1 // loop_header
      %s15 = sphi 0, %s19
      %p16 = scmp.ge.s32.totalorder %s15, 4
      %s22 = sphi 0, %s34
      %s23 = sphi 0, %s30
      %s24 = sphi 0, %s22
      %s25 = sphi 0, %s23
      %s26 = sphi 0, %s24
      %s27 = sphi 0, %s25
      %s35 = sphi 0, %s35
      %s37 = sphi 0, %s35
      %s38 = sphi 0, %s37
      %s52 = sphi 0, %s38
      %s60 = sphi 0, %s62
      %s63 = sphi 0, %s60
      %s64 = sphi 0, %s63
      %s80 = sphi 0, %s64
      %s88 = sphi 0, %s90
      %s91 = sphi 0, %s88
      %s92 = sphi 0, %s91
      %s108 = sphi 0, %s92
    $region4: #{tpu_custom_call.1} parent=1 // loop_header_branch
      %18 = sbr.rel (%p16) target = $region8
    $region5: #{tpu_custom_call.1} parent=1 // loop_body
      %s20 = ssub.s32 %s15, 1
      %s21 = ssub.s32 %s15, 2
      %s28 = sadd.s32 1, %s23
      %p29 = scmp.ge.s32.totalorder %s28, 1
      %s30 = scalar_select %p29, 0, %s28
      %s31 = sadd.s32 1, %s22
      %s32 = scalar_select %p29, %s31, %s22
      %p33 = scmp.ge.s32.totalorder %s32, 2
      %s34 = scalar_select %p33, 0, %s32
      %s36 = sadd.s32 %s35, 1
      %p39 = scmp.eq.s32.totalorder %s15, 1
      %p40 = scmp.ne.s32.totalorder %s35, %s37
      %p41 = scmp.eq.s32.totalorder %s15, 0
      %p42 = por %p40, %p41
      %p43 = scmp.ne.s32.totalorder %s35, %s37
      %p44 = scmp.eq.s32.totalorder %s20, 1
      %p45 = por %p43, %p44
      %p46 = scmp.ne.s32.totalorder %s37, %s38
      %p47 = scmp.eq.s32.totalorder %s20, 0
      %p48 = por %p46, %p47
      %p49 = scmp.ne.s32.totalorder %s37, %s38
      %p50 = scmp.eq.s32.totalorder %s21, 1
      %p51 = por %p49, %p50
      %p53 = scmp.ne.s32.totalorder %s38, %s52
      %p54 = scmp.eq.s32.totalorder %s21, 0
      %p55 = por %p53, %p54
      %s56 = ssub.s32 %s22, %s34
      %s57 = ssub.s32 %s23, %s30
      %s58 = sor.u32 %s56, %s57
      %p59 = scmp.eq.s32.totalorder %s58, 0
      %s61 = sadd.s32 %s60, 1
      %s62 = scalar_select %p59, %s60, %s61
      %p65 = pneg %p59
      %p66 = scmp.eq.s32.totalorder %s15, 1
      %p67 = por %p65, %p66
      %p68 = scmp.ne.s32.totalorder %s60, %s63
      %p69 = scmp.eq.s32.totalorder %s15, 0
      %p70 = por %p68, %p69
      %p71 = scmp.ne.s32.totalorder %s60, %s63
      %p72 = scmp.eq.s32.totalorder %s20, 1
      %p73 = por %p71, %p72
      %p74 = scmp.ne.s32.totalorder %s63, %s64
      %p75 = scmp.eq.s32.totalorder %s20, 0
      %p76 = por %p74, %p75
      %p77 = scmp.ne.s32.totalorder %s63, %s64
      %p78 = scmp.eq.s32.totalorder %s21, 1
      %p79 = por %p77, %p78
      %p81 = scmp.ne.s32.totalorder %s64, %s80
      %p82 = scmp.eq.s32.totalorder %s21, 0
      %p83 = por %p81, %p82
      %s84 = ssub.s32 %s22, %s34
      %s85 = ssub.s32 %s23, %s30
      %s86 = sor.u32 %s84, %s85
      %p87 = scmp.eq.s32.totalorder %s86, 0
      %s89 = sadd.s32 %s88, 1
      %s90 = scalar_select %p87, %s88, %s89
      %p93 = pneg %p87
      %p94 = scmp.eq.s32.totalorder %s15, 1
      %p95 = por %p93, %p94
      %p96 = scmp.ne.s32.totalorder %s88, %s91
      %p97 = scmp.eq.s32.totalorder %s15, 0
      %p98 = por %p96, %p97
      %p99 = scmp.ne.s32.totalorder %s88, %s91
      %p100 = scmp.eq.s32.totalorder %s20, 1
      %p101 = por %p99, %p100
      %p102 = scmp.ne.s32.totalorder %s91, %s92
      %p103 = scmp.eq.s32.totalorder %s20, 0
      %p104 = por %p102, %p103
      %p105 = scmp.ne.s32.totalorder %s91, %s92
      %p106 = scmp.eq.s32.totalorder %s21, 1
      %p107 = por %p105, %p106
      %p109 = scmp.ne.s32.totalorder %s92, %s108
      %p110 = scmp.eq.s32.totalorder %s21, 0
      %p111 = por %p109, %p110
      %p112 = scmp.le.s32.totalorder 1, %s15
      %p113 = scmp.lt.s32.totalorder %s15, 3
      %p114 = pnand %p112, %p113
      %p115 = pneg %p114
      // Predicated region
      $region9: #{tpu_custom_call.1} parent=5 // pred_check
        _
      $region10: #{tpu_custom_call.1} parent=5 // pred_check_branch
        %117 = sbr.rel (%p114) target = $region12
      $region11: #{tpu_custom_call.1} parent=5 // pred_region
        %s118 = ssub.s32 %s15, 1
        // Predicated region
        $region13: #{tpu_custom_call.1} parent=11 // pred_check
          %p119 = pneg %p48
        $region14: #{tpu_custom_call.1} parent=11 // pred_check_branch
          %121 = sbr.rel (%p119) target = $region16
        $region15: #{tpu_custom_call.1} parent=11 // pred_region
          %123 = vsyncadd [#allocation3], 0
          %s125 = sshll.u32 %s0, 4
          %s126 = int_to_ptr.hbm [resolvable:$true] %s125
          %s127 = sshll.u32 [#allocation2], 4
          %s128 = int_to_ptr.vmem [resolvable:$true] %s127
          %130 = dma.hbm_to_vmem [thread:$0]  %s126, 64, %s128, [#allocation3]
        $region16: #{tpu_custom_call.1} parent=11 // pred_fallthru
          _
      $region12: #{tpu_custom_call.1} parent=5 // pred_fallthru
        _
      %p131 = scmp.lt.s32.totalorder %s15, 2
      // Predicated region
      $region17: #{tpu_custom_call.1} parent=5 // pred_check
        %p132 = pneg %p131
      $region18: #{tpu_custom_call.1} parent=5 // pred_check_branch
        %134 = sbr.rel (%p132) target = $region20
      $region19: #{tpu_custom_call.1} parent=5 // pred_region
        // Predicated region
        $region21: #{tpu_custom_call.1} parent=19 // pred_check
          %p135 = pneg %p70
        $region22: #{tpu_custom_call.1} parent=19 // pred_check_branch
          %137 = sbr.rel (%p135) target = $region24
        $region23: #{tpu_custom_call.1} parent=19 // pred_region
          %s138 = sand.u32 %s60, 1
          %s139 = scalar_lea.sflag [#allocation6], %s138
          %s140 = sand.u32 %s60, 1
          %s141 = smul.addr %s140, 128
          %s142 = scalar_lea.vmem [#allocation5], %s141
          %s143 = smul.u32 4, %s23
          %145 = vsyncadd %s139, 0
          %s146 = smul.addr %s143, 4
          %s147 = smul.addr %s22, 32
          %s148 = sadd.s32 %s146, %s147
          %s149 = smul.addr %s148, 4
          %s150 = scalar_lea.hbm %s1, %s149
          %s151 = sshll.u32 %s150, 4
          %s152 = int_to_ptr.hbm [resolvable:$true] %s151
          %s153 = sshll.u32 %s142, 4
          %s154 = int_to_ptr.vmem [resolvable:$true] %s153
          %159 = dma.hbm_to_vmem [thread:$0]  %s152, 2048, %s154, %s139, 128, 128, 8
        $region24: #{tpu_custom_call.1} parent=19 // pred_fallthru
          _
      $region20: #{tpu_custom_call.1} parent=5 // pred_fallthru
        _
      %p160 = scmp.le.s32.totalorder 1, %s15
      %p161 = scmp.lt.s32.totalorder %s15, 3
      %p162 = pnand %p160, %p161
      %p163 = pneg %p162
      // Predicated region
      $region25: #{tpu_custom_call.1} parent=5 // pred_check
        _
      $region26: #{tpu_custom_call.1} parent=5 // pred_check_branch
        %165 = sbr.rel (%p162) target = $region28
      $region27: #{tpu_custom_call.1} parent=5 // pred_region
        %s166 = ssub.s32 %s15, 1
        // Predicated region
        $region29: #{tpu_custom_call.1} parent=27 // pred_check
          %p167 = pneg %p48
        $region30: #{tpu_custom_call.1} parent=27 // pred_check_branch
          %169 = sbr.rel (%p167) target = $region32
        $region31: #{tpu_custom_call.1} parent=27 // pred_region
          %171 = dma.done [#allocation3], 64
        $region32: #{tpu_custom_call.1} parent=27 // pred_fallthru
          _
        %s172 = sand.u32 %s63, 1
        %s173 = scalar_lea.sflag [#allocation6], %s172
        %s174 = sand.u32 %s63, 1
        %s175 = smul.addr %s174, 128
        %s176 = scalar_lea.vmem [#allocation5], %s175
        // Predicated region
        $region33: #{tpu_custom_call.1} parent=27 // pred_check
          %p177 = pneg %p76
        $region34: #{tpu_custom_call.1} parent=27 // pred_check_branch
          %179 = sbr.rel (%p177) target = $region36
        $region35: #{tpu_custom_call.1} parent=27 // pred_region
          %181 = dma.done %s173, 2048
        $region36: #{tpu_custom_call.1} parent=27 // pred_fallthru
          _
        %p182 = pneg %p48
        %p183 = pneg %p45
        %s184 = sand.u32 %s63, 1
        %s185 = scalar_lea.sflag [#allocation6], %s184
        %s186 = sand.u32 %s63, 1
        %s187 = smul.addr %s186, 128
        %s188 = scalar_lea.vmem [#allocation5], %s187
        %p189 = pneg %p76
        %p190 = pneg %p73
        %p191 = pneg %p104
        %p192 = pneg %p101
        %s193 = sand.u32 %s91, 1
        %s194 = scalar_lea.sflag [#allocation4], %s193
        %s195 = sand.u32 %s91, 1
        %s196 = smul.addr %s195, 128
        %s197 = scalar_lea.vmem [#allocation7], %s196
        %s198 = smul.u32 4, %s25
        %s199 = smul.u32 4, %s25
        %v200 = vld [vmem:[#allocation2] sm:$0xf]
        %v201 = vld [vmem:[%s176] sm:$0xff]
        %v202 = vld [vmem:[%s176 + $0x10] sm:$0xff]
        %v203 = vld [vmem:[%s176 + $0x20] sm:$0xff]
        %v204 = vld [vmem:[%s176 + $0x30] sm:$0xff]
        %209 = vst [vmem:[#allocation1] ss:$2 sm:$0xff] %v201
        %v210 = vld.sshfl [vmem:[#allocation1] sm:$0xff pattern:$0x75316420]
        %v211 = vld.sshfl [vmem:[#allocation1 + $0x8] sm:$0xff pattern:$0x75316420]
        %s212 = scalar_lea.vmem [#allocation1], 16
        %213 = vst [vmem:[%s212] ss:$2 sm:$0xff] %v202
        %v214 = vld.sshfl [vmem:[#allocation1 + $0x10] sm:$0xff pattern:$0x75316420]
        %v215 = vld.sshfl [vmem:[#allocation1 + $0x18] sm:$0xff pattern:$0x75316420]
        %s216 = scalar_lea.vmem [#allocation1], 32
        %217 = vst [vmem:[%s216] ss:$2 sm:$0xff] %v203
        %v218 = vld.sshfl [vmem:[#allocation1 + $0x20] sm:$0xff pattern:$0x75316420]
        %v219 = vld.sshfl [vmem:[#allocation1 + $0x28] sm:$0xff pattern:$0x75316420]
        %s220 = scalar_lea.vmem [#allocation1], 48
        %221 = vst [vmem:[%s220] ss:$2 sm:$0xff] %v204
        %v222 = vld.sshfl [vmem:[#allocation1 + $0x30] sm:$0xff pattern:$0x75316420]
        %v223 = vld.sshfl [vmem:[#allocation1 + $0x38] sm:$0xff pattern:$0x75316420]
        %vm232 = vcmask 1043456
        %v233 = vsel %vm232, %v210, 0.0
        %v234 = vsel %vm232, %v211, 0.0
        %v235 = vadd.f32 %v233, %v234
        %236 = vadd.xlane.f32.xlu0 %v235
        %v237 = vpop.xlane.xlu0 %236
        %v238 = vsel %vm232, %v214, 0.0
        %v239 = vsel %vm232, %v215, 0.0
        %v240 = vadd.f32 %v238, %v239
        %241 = vadd.xlane.f32.xlu0 %v240
        %v242 = vpop.xlane.xlu0 %241
        %v243 = vsel %vm232, %v218, 0.0
        %v244 = vsel %vm232, %v219, 0.0
        %v245 = vadd.f32 %v243, %v244
        %246 = vadd.xlane.f32.xlu0 %v245
        %v247 = vpop.xlane.xlu0 %246
        %v248 = vsel %vm232, %v222, 0.0
        %v249 = vsel %vm232, %v223, 0.0
        %v250 = vadd.f32 %v248, %v249
        %251 = vadd.xlane.f32.xlu0 %v250
        %v252 = vpop.xlane.xlu0 %251
        %v253 = vrcp.pop 256.0
        %v254 = vmul.f32 256.0, %v253
        %v255 = vsub.f32 1.0, %v254
        %v256 = vmul.f32 %v253, %v255
        %v257 = vadd.f32 %v253, %v256
        %vm258 = vweird.f32 %v253
        %v259 = vsel %vm258, %v253, %v257
        %v260 = vmul.f32 %v237, %v259
        %v261 = vmul.f32 %v242, %v259
        %v262 = vmul.f32 %v247, %v259
        %v263 = vmul.f32 %v252, %v259
        %v264 = vmul.f32 %v200, %v260
        %v265 = vmul.f32 %v200, %v261
        %v266 = vmul.f32 %v200, %v262
        %v267 = vmul.f32 %v200, %v263
        %269 = vrot.lane.b32.xlu0 %v200, 127
        %v270 = vpop.permute.xlu0 %269
        %v272 = vadd.f32 %v264, %v270
        %v273 = vadd.f32 %v265, %v270
        %v274 = vadd.f32 %v266, %v270
        %v275 = vadd.f32 %v267, %v270
        %v276 = vxor.u32 %v272, 2147483648
        %v277 = vxor.u32 %v273, 2147483648
        %v278 = vxor.u32 %v274, 2147483648
        %v279 = vxor.u32 %v275, 2147483648
        %v280 = vmul.f32 %v276, 1.442695
        %v281 = vpow.pop %v280
        %v282 = vmul.f32 %v277, 1.442695
        %v283 = vpow.pop %v282
        %v284 = vmul.f32 %v278, 1.442695
        %v285 = vpow.pop %v284
        %v286 = vmul.f32 %v279, 1.442695
        %v287 = vpow.pop %v286
        %v288 = vadd.f32 %v281, 1.0
        %v289 = vadd.f32 %v283, 1.0
        %v290 = vadd.f32 %v285, 1.0
        %v291 = vadd.f32 %v287, 1.0
        %v292 = vrcp.pop %v288
        %v293 = vmul.f32 %v288, %v292
        %v294 = vsub.f32 1.0, %v293
        %v295 = vmul.f32 %v292, %v294
        %v296 = vadd.f32 %v292, %v295
        %vm297 = vweird.f32 %v288
        %vm298 = vweird.f32 %v292
        %vm299 = vmor %vm297, %vm298
        %v300 = vsel %vm299, %v292, %v296
        %v301 = vand.u32 2147483647, %v288
        %vm302 = vcmp.eq.f32.partialorder %v301, 8.507059e+37
        %v303 = vand.u32 %v288, 2147483648
        %v304 = vor.u32 1.1754944e-38, %v303
        %v305 = vsel %vm302, %v304, %v300
        %v306 = vmul.f32 1.0, %v305
        %v307 = vrcp.pop %v289
        %v308 = vmul.f32 %v289, %v307
        %v309 = vsub.f32 1.0, %v308
        %v310 = vmul.f32 %v307, %v309
        %v311 = vadd.f32 %v307, %v310
        %vm312 = vweird.f32 %v289
        %vm313 = vweird.f32 %v307
        %vm314 = vmor %vm312, %vm313
        %v315 = vsel %vm314, %v307, %v311
        %v316 = vand.u32 2147483647, %v289
        %vm317 = vcmp.eq.f32.partialorder %v316, 8.507059e+37
        %v318 = vand.u32 %v289, 2147483648
        %v319 = vor.u32 1.1754944e-38, %v318
        %v320 = vsel %vm317, %v319, %v315
        %v321 = vmul.f32 1.0, %v320
        %v322 = vrcp.pop %v290
        %v323 = vmul.f32 %v290, %v322
        %v324 = vsub.f32 1.0, %v323
        %v325 = vmul.f32 %v322, %v324
        %v326 = vadd.f32 %v322, %v325
        %vm327 = vweird.f32 %v290
        %vm328 = vweird.f32 %v322
        %vm329 = vmor %vm327, %vm328
        %v330 = vsel %vm329, %v322, %v326
        %v331 = vand.u32 2147483647, %v290
        %vm332 = vcmp.eq.f32.partialorder %v331, 8.507059e+37
        %v333 = vand.u32 %v290, 2147483648
        %v334 = vor.u32 1.1754944e-38, %v333
        %v335 = vsel %vm332, %v334, %v330
        %v336 = vmul.f32 1.0, %v335
        %v337 = vrcp.pop %v291
        %v338 = vmul.f32 %v291, %v337
        %v339 = vsub.f32 1.0, %v338
        %v340 = vmul.f32 %v337, %v339
        %v341 = vadd.f32 %v337, %v340
        %vm342 = vweird.f32 %v291
        %vm343 = vweird.f32 %v337
        %vm344 = vmor %vm342, %vm343
        %v345 = vsel %vm344, %v337, %v341
        %v346 = vand.u32 2147483647, %v291
        %vm347 = vcmp.eq.f32.partialorder %v346, 8.507059e+37
        %v348 = vand.u32 %v291, 2147483648
        %v349 = vor.u32 1.1754944e-38, %v348
        %v350 = vsel %vm347, %v349, %v345
        %v351 = vmul.f32 1.0, %v350
        %353 = vset.pattern.permute.xlu0 0
        %354 = vperm.xlu0 %353, %v306
        %v355 = vpop.permute.xlu0 %354
        %357 = vset.pattern.permute.xlu0 0
        %358 = vperm.xlu0 %357, %v321
        %v359 = vpop.permute.xlu0 %358
        %361 = vset.pattern.permute.xlu0 0
        %362 = vperm.xlu0 %361, %v336
        %v363 = vpop.permute.xlu0 %362
        %365 = vset.pattern.permute.xlu0 0
        %366 = vperm.xlu0 %365, %v351
        %v367 = vpop.permute.xlu0 %366
        %v369 = vunpack.c.l.s4 839922192
        %v370 = vunpack.c.0.s8 %v369
        %v371 = vperm.slane %v355, %v370
        %v373 = vunpack.c.l.s4 839922192
        %v374 = vunpack.c.0.s8 %v373
        %v375 = vperm.slane %v359, %v374
        %v377 = vunpack.c.l.s4 839922192
        %v378 = vunpack.c.0.s8 %v377
        %v379 = vperm.slane %v363, %v378
        %v381 = vunpack.c.l.s4 839922192
        %v382 = vunpack.c.0.s8 %v381
        %v383 = vperm.slane %v367, %v382
        %v388 = vmul.f32 %v201, %v371
        %v389 = vmul.f32 %v202, %v375
        %v390 = vmul.f32 %v203, %v379
        %v391 = vmul.f32 %v204, %v383
        %s392 = scalar_lea.vmem %s176, 8 [#allocation5]
        %v393 = vld [vmem:[%s392] sm:$0xff]
        %v394 = vld [vmem:[%s392 + $0x10] sm:$0xff]
        %v395 = vld [vmem:[%s392 + $0x20] sm:$0xff]
        %v396 = vld [vmem:[%s392 + $0x30] sm:$0xff]
        %401 = vst [vmem:[#allocation1] ss:$2 sm:$0xff] %v393
        %v402 = vld.sshfl [vmem:[#allocation1] sm:$0xff pattern:$0x75316420]
        %v403 = vld.sshfl [vmem:[#allocation1 + $0x8] sm:$0xff pattern:$0x75316420]
        %s404 = scalar_lea.vmem [#allocation1], 16
        %405 = vst [vmem:[%s404] ss:$2 sm:$0xff] %v394
        %v406 = vld.sshfl [vmem:[#allocation1 + $0x10] sm:$0xff pattern:$0x75316420]
        %v407 = vld.sshfl [vmem:[#allocation1 + $0x18] sm:$0xff pattern:$0x75316420]
        %s408 = scalar_lea.vmem [#allocation1], 32
        %409 = vst [vmem:[%s408] ss:$2 sm:$0xff] %v395
        %v410 = vld.sshfl [vmem:[#allocation1 + $0x20] sm:$0xff pattern:$0x75316420]
        %v411 = vld.sshfl [vmem:[#allocation1 + $0x28] sm:$0xff pattern:$0x75316420]
        %s412 = scalar_lea.vmem [#allocation1], 48
        %413 = vst [vmem:[%s412] ss:$2 sm:$0xff] %v396
        %v414 = vld.sshfl [vmem:[#allocation1 + $0x30] sm:$0xff pattern:$0x75316420]
        %v415 = vld.sshfl [vmem:[#allocation1 + $0x38] sm:$0xff pattern:$0x75316420]
        %v424 = vsel %vm232, %v402, 0.0
        %v425 = vsel %vm232, %v403, 0.0
        %v426 = vadd.f32 %v424, %v425
        %427 = vadd.xlane.f32.xlu0 %v426
        %v428 = vpop.xlane.xlu0 %427
        %v429 = vsel %vm232, %v406, 0.0
        %v430 = vsel %vm232, %v407, 0.0
        %v431 = vadd.f32 %v429, %v430
        %432 = vadd.xlane.f32.xlu0 %v431
        %v433 = vpop.xlane.xlu0 %432
        %v434 = vsel %vm232, %v410, 0.0
        %v435 = vsel %vm232, %v411, 0.0
        %v436 = vadd.f32 %v434, %v435
        %437 = vadd.xlane.f32.xlu0 %v436
        %v438 = vpop.xlane.xlu0 %437
        %v439 = vsel %vm232, %v414, 0.0
        %v440 = vsel %vm232, %v415, 0.0
        %v441 = vadd.f32 %v439, %v440
        %442 = vadd.xlane.f32.xlu0 %v441
        %v443 = vpop.xlane.xlu0 %442
        %v444 = vmul.f32 %v428, %v259
        %v445 = vmul.f32 %v433, %v259
        %v446 = vmul.f32 %v438, %v259
        %v447 = vmul.f32 %v443, %v259
        %v453 = vunpack.c.l.s4 839922192
        %v454 = vunpack.c.0.s8 %v453
        %v455 = vperm.slane %v444, %v454
        %v457 = vunpack.c.l.s4 839922192
        %v458 = vunpack.c.0.s8 %v457
        %v459 = vperm.slane %v445, %v458
        %v461 = vunpack.c.l.s4 839922192
        %v462 = vunpack.c.0.s8 %v461
        %v463 = vperm.slane %v446, %v462
        %v465 = vunpack.c.l.s4 839922192
        %v466 = vunpack.c.0.s8 %v465
        %v467 = vperm.slane %v447, %v466
        %v472 = vsub.f32 %v393, %v455
        %v473 = vsub.f32 %v394, %v459
        %v474 = vsub.f32 %v395, %v463
        %v475 = vsub.f32 %v396, %v467
        %v476 = vmul.f32 %v472, %v472
        %v477 = vmul.f32 %v473, %v473
        %v478 = vmul.f32 %v474, %v474
        %v479 = vmul.f32 %v475, %v475
        %484 = vst [vmem:[#allocation1] ss:$2 sm:$0xff] %v476
        %v485 = vld.sshfl [vmem:[#allocation1] sm:$0xff pattern:$0x75316420]
        %v486 = vld.sshfl [vmem:[#allocation1 + $0x8] sm:$0xff pattern:$0x75316420]
        %s487 = scalar_lea.vmem [#allocation1], 16
        %488 = vst [vmem:[%s487] ss:$2 sm:$0xff] %v477
        %v489 = vld.sshfl [vmem:[#allocation1 + $0x10] sm:$0xff pattern:$0x75316420]
        %v490 = vld.sshfl [vmem:[#allocation1 + $0x18] sm:$0xff pattern:$0x75316420]
        %s491 = scalar_lea.vmem [#allocation1], 32
        %492 = vst [vmem:[%s491] ss:$2 sm:$0xff] %v478
        %v493 = vld.sshfl [vmem:[#allocation1 + $0x20] sm:$0xff pattern:$0x75316420]
        %v494 = vld.sshfl [vmem:[#allocation1 + $0x28] sm:$0xff pattern:$0x75316420]
        %s495 = scalar_lea.vmem [#allocation1], 48
        %496 = vst [vmem:[%s495] ss:$2 sm:$0xff] %v479
        %v497 = vld.sshfl [vmem:[#allocation1 + $0x30] sm:$0xff pattern:$0x75316420]
        %v498 = vld.sshfl [vmem:[#allocation1 + $0x38] sm:$0xff pattern:$0x75316420]
        %v507 = vsel %vm232, %v485, 0.0
        %v508 = vsel %vm232, %v486, 0.0
        %v509 = vadd.f32 %v507, %v508
        %510 = vadd.xlane.f32.xlu0 %v509
        %v511 = vpop.xlane.xlu0 %510
        %v512 = vsel %vm232, %v489, 0.0
        %v513 = vsel %vm232, %v490, 0.0
        %v514 = vadd.f32 %v512, %v513
        %515 = vadd.xlane.f32.xlu0 %v514
        %v516 = vpop.xlane.xlu0 %515
        %v517 = vsel %vm232, %v493, 0.0
        %v518 = vsel %vm232, %v494, 0.0
        %v519 = vadd.f32 %v517, %v518
        %520 = vadd.xlane.f32.xlu0 %v519
        %v521 = vpop.xlane.xlu0 %520
        %v522 = vsel %vm232, %v497, 0.0
        %v523 = vsel %vm232, %v498, 0.0
        %v524 = vadd.f32 %v522, %v523
        %525 = vadd.xlane.f32.xlu0 %v524
        %v526 = vpop.xlane.xlu0 %525
        %v527 = vmul.f32 %v511, %v259
        %v528 = vmul.f32 %v516, %v259
        %v529 = vmul.f32 %v521, %v259
        %v530 = vmul.f32 %v526, %v259
        %v531 = vadd.f32 %v527, 1e-05
        %v532 = vadd.f32 %v528, 1e-05
        %v533 = vadd.f32 %v529, 1e-05
        %v534 = vadd.f32 %v530, 1e-05
        %v535 = vrsqrt.pop %v531
        %v536 = vmul.f32 %v535, %v531
        %v537 = vmul.f32 %v536, %v535
        %v538 = vmul.f32 0.5, %v537
        %v539 = vsub.f32 1.5, %v538
        %v540 = vmul.f32 %v535, %v539
        %vm541 = vweird.f32 %v531
        %vm542 = vweird.f32 %v535
        %vm543 = vmor %vm541, %vm542
        %v544 = vsel %vm543, %v535, %v540
        %v545 = vrsqrt.pop %v532
        %v546 = vmul.f32 %v545, %v532
        %v547 = vmul.f32 %v546, %v545
        %v548 = vmul.f32 0.5, %v547
        %v549 = vsub.f32 1.5, %v548
        %v550 = vmul.f32 %v545, %v549
        %vm551 = vweird.f32 %v532
        %vm552 = vweird.f32 %v545
        %vm553 = vmor %vm551, %vm552
        %v554 = vsel %vm553, %v545, %v550
        %v555 = vrsqrt.pop %v533
        %v556 = vmul.f32 %v555, %v533
        %v557 = vmul.f32 %v556, %v555
        %v558 = vmul.f32 0.5, %v557
        %v559 = vsub.f32 1.5, %v558
        %v560 = vmul.f32 %v555, %v559
        %vm561 = vweird.f32 %v533
        %vm562 = vweird.f32 %v555
        %vm563 = vmor %vm561, %vm562
        %v564 = vsel %vm563, %v555, %v560
        %v565 = vrsqrt.pop %v534
        %v566 = vmul.f32 %v565, %v534
        %v567 = vmul.f32 %v566, %v565
        %v568 = vmul.f32 0.5, %v567
        %v569 = vsub.f32 1.5, %v568
        %v570 = vmul.f32 %v565, %v569
        %vm571 = vweird.f32 %v534
        %vm572 = vweird.f32 %v565
        %vm573 = vmor %vm571, %vm572
        %v574 = vsel %vm573, %v565, %v570
        %v580 = vunpack.c.l.s4 839922192
        %v581 = vunpack.c.0.s8 %v580
        %v582 = vperm.slane %v544, %v581
        %v584 = vunpack.c.l.s4 839922192
        %v585 = vunpack.c.0.s8 %v584
        %v586 = vperm.slane %v554, %v585
        %v588 = vunpack.c.l.s4 839922192
        %v589 = vunpack.c.0.s8 %v588
        %v590 = vperm.slane %v564, %v589
        %v592 = vunpack.c.l.s4 839922192
        %v593 = vunpack.c.0.s8 %v592
        %v594 = vperm.slane %v574, %v593
        %v599 = vmul.f32 %v472, %v582
        %v600 = vmul.f32 %v473, %v586
        %v601 = vmul.f32 %v474, %v590
        %v602 = vmul.f32 %v475, %v594
        %603 = vset.pattern.permute.xlu0 4
        %604 = vperm.xlu0 %603, %v200
        %v605 = vpop.permute.xlu0 %604
        %v607 = vunpack.c.l.s4 839922192
        %v608 = vunpack.c.0.s8 %v607
        %v609 = vperm.slane %v605, %v608
        %v611 = vmul.f32 %v599, %v609
        %v612 = vmul.f32 %v600, %v609
        %v613 = vmul.f32 %v601, %v609
        %v614 = vmul.f32 %v602, %v609
        %615 = vset.pattern.permute.xlu0 5
        %616 = vperm.xlu0 %615, %v200
        %v617 = vpop.permute.xlu0 %616
        %v619 = vunpack.c.l.s4 839922192
        %v620 = vunpack.c.0.s8 %v619
        %v621 = vperm.slane %v617, %v620
        %v623 = vadd.f32 %v611, %v621
        %v624 = vadd.f32 %v612, %v621
        %v625 = vadd.f32 %v613, %v621
        %v626 = vadd.f32 %v614, %v621
        %627 = vset.pattern.permute.xlu0 2
        %628 = vperm.xlu0 %627, %v200
        %v629 = vpop.permute.xlu0 %628
        %635 = vst [vmem:[#allocation1] ss:$2 sm:$0xff] %v623
        %v636 = vld.sshfl [vmem:[#allocation1] sm:$0xff pattern:$0x75316420]
        %v637 = vld.sshfl [vmem:[#allocation1 + $0x8] sm:$0xff pattern:$0x75316420]
        %s638 = scalar_lea.vmem [#allocation1], 16
        %639 = vst [vmem:[%s638] ss:$2 sm:$0xff] %v624
        %v640 = vld.sshfl [vmem:[#allocation1 + $0x10] sm:$0xff pattern:$0x75316420]
        %v641 = vld.sshfl [vmem:[#allocation1 + $0x18] sm:$0xff pattern:$0x75316420]
        %s642 = scalar_lea.vmem [#allocation1], 32
        %643 = vst [vmem:[%s642] ss:$2 sm:$0xff] %v625
        %v644 = vld.sshfl [vmem:[#allocation1 + $0x20] sm:$0xff pattern:$0x75316420]
        %v645 = vld.sshfl [vmem:[#allocation1 + $0x28] sm:$0xff pattern:$0x75316420]
        %s646 = scalar_lea.vmem [#allocation1], 48
        %647 = vst [vmem:[%s646] ss:$2 sm:$0xff] %v626
        %v648 = vld.sshfl [vmem:[#allocation1 + $0x30] sm:$0xff pattern:$0x75316420]
        %v649 = vld.sshfl [vmem:[#allocation1 + $0x38] sm:$0xff pattern:$0x75316420]
        %v658 = vmul.f32 %v629, %v636
        %v659 = vmul.f32 %v629, %v637
        %v660 = vmul.f32 %v629, %v640
        %v661 = vmul.f32 %v629, %v641
        %v662 = vmul.f32 %v629, %v644
        %v663 = vmul.f32 %v629, %v645
        %v664 = vmul.f32 %v629, %v648
        %v665 = vmul.f32 %v629, %v649
        %666 = vset.pattern.permute.xlu0 3
        %667 = vperm.xlu0 %666, %v200
        %v668 = vpop.permute.xlu0 %667
        %v670 = vadd.f32 %v658, %v668
        %v671 = vadd.f32 %v659, %v668
        %v672 = vadd.f32 %v660, %v668
        %v673 = vadd.f32 %v661, %v668
        %v674 = vadd.f32 %v662, %v668
        %v675 = vadd.f32 %v663, %v668
        %v676 = vadd.f32 %v664, %v668
        %v677 = vadd.f32 %v665, %v668
        %v678 = vxor.u32 %v670, 2147483648
        %v679 = vxor.u32 %v671, 2147483648
        %v680 = vxor.u32 %v672, 2147483648
        %v681 = vxor.u32 %v673, 2147483648
        %v682 = vxor.u32 %v674, 2147483648
        %v683 = vxor.u32 %v675, 2147483648
        %v684 = vxor.u32 %v676, 2147483648
        %v685 = vxor.u32 %v677, 2147483648
        %v686 = vmul.f32 %v678, 1.442695
        %v687 = vpow.pop %v686
        %v688 = vmul.f32 %v679, 1.442695
        %v689 = vpow.pop %v688
        %v690 = vmul.f32 %v680, 1.442695
        %v691 = vpow.pop %v690
        %v692 = vmul.f32 %v681, 1.442695
        %v693 = vpow.pop %v692
        %v694 = vmul.f32 %v682, 1.442695
        %v695 = vpow.pop %v694
        %v696 = vmul.f32 %v683, 1.442695
        %v697 = vpow.pop %v696
        %v698 = vmul.f32 %v684, 1.442695
        %v699 = vpow.pop %v698
        %v700 = vmul.f32 %v685, 1.442695
        %v701 = vpow.pop %v700
        %v702 = vadd.f32 %v687, 1.0
        %v703 = vadd.f32 %v689, 1.0
        %v704 = vadd.f32 %v691, 1.0
        %v705 = vadd.f32 %v693, 1.0
        %v706 = vadd.f32 %v695, 1.0
        %v707 = vadd.f32 %v697, 1.0
        %v708 = vadd.f32 %v699, 1.0
        %v709 = vadd.f32 %v701, 1.0
        %v710 = vrcp.pop %v702
        %v711 = vmul.f32 %v702, %v710
        %v712 = vsub.f32 1.0, %v711
        %v713 = vmul.f32 %v710, %v712
        %v714 = vadd.f32 %v710, %v713
        %vm715 = vweird.f32 %v702
        %vm716 = vweird.f32 %v710
        %vm717 = vmor %vm715, %vm716
        %v718 = vsel %vm717, %v710, %v714
        %v719 = vand.u32 2147483647, %v702
        %vm720 = vcmp.eq.f32.partialorder %v719, 8.507059e+37
        %v721 = vand.u32 %v702, 2147483648
        %v722 = vor.u32 1.1754944e-38, %v721
        %v723 = vsel %vm720, %v722, %v718
        %v724 = vmul.f32 1.0, %v723
        %v725 = vrcp.pop %v703
        %v726 = vmul.f32 %v703, %v725
        %v727 = vsub.f32 1.0, %v726
        %v728 = vmul.f32 %v725, %v727
        %v729 = vadd.f32 %v725, %v728
        %vm730 = vweird.f32 %v703
        %vm731 = vweird.f32 %v725
        %vm732 = vmor %vm730, %vm731
        %v733 = vsel %vm732, %v725, %v729
        %v734 = vand.u32 2147483647, %v703
        %vm735 = vcmp.eq.f32.partialorder %v734, 8.507059e+37
        %v736 = vand.u32 %v703, 2147483648
        %v737 = vor.u32 1.1754944e-38, %v736
        %v738 = vsel %vm735, %v737, %v733
        %v739 = vmul.f32 1.0, %v738
        %v740 = vrcp.pop %v704
        %v741 = vmul.f32 %v704, %v740
        %v742 = vsub.f32 1.0, %v741
        %v743 = vmul.f32 %v740, %v742
        %v744 = vadd.f32 %v740, %v743
        %vm745 = vweird.f32 %v704
        %vm746 = vweird.f32 %v740
        %vm747 = vmor %vm745, %vm746
        %v748 = vsel %vm747, %v740, %v744
        %v749 = vand.u32 2147483647, %v704
        %vm750 = vcmp.eq.f32.partialorder %v749, 8.507059e+37
        %v751 = vand.u32 %v704, 2147483648
        %v752 = vor.u32 1.1754944e-38, %v751
        %v753 = vsel %vm750, %v752, %v748
        %v754 = vmul.f32 1.0, %v753
        %v755 = vrcp.pop %v705
        %v756 = vmul.f32 %v705, %v755
        %v757 = vsub.f32 1.0, %v756
        %v758 = vmul.f32 %v755, %v757
        %v759 = vadd.f32 %v755, %v758
        %vm760 = vweird.f32 %v705
        %vm761 = vweird.f32 %v755
        %vm762 = vmor %vm760, %vm761
        %v763 = vsel %vm762, %v755, %v759
        %v764 = vand.u32 2147483647, %v705
        %vm765 = vcmp.eq.f32.partialorder %v764, 8.507059e+37
        %v766 = vand.u32 %v705, 2147483648
        %v767 = vor.u32 1.1754944e-38, %v766
        %v768 = vsel %vm765, %v767, %v763
        %v769 = vmul.f32 1.0, %v768
        %v770 = vrcp.pop %v706
        %v771 = vmul.f32 %v706, %v770
        %v772 = vsub.f32 1.0, %v771
        %v773 = vmul.f32 %v770, %v772
        %v774 = vadd.f32 %v770, %v773
        %vm775 = vweird.f32 %v706
        %vm776 = vweird.f32 %v770
        %vm777 = vmor %vm775, %vm776
        %v778 = vsel %vm777, %v770, %v774
        %v779 = vand.u32 2147483647, %v706
        %vm780 = vcmp.eq.f32.partialorder %v779, 8.507059e+37
        %v781 = vand.u32 %v706, 2147483648
        %v782 = vor.u32 1.1754944e-38, %v781
        %v783 = vsel %vm780, %v782, %v778
        %v784 = vmul.f32 1.0, %v783
        %v785 = vrcp.pop %v707
        %v786 = vmul.f32 %v707, %v785
        %v787 = vsub.f32 1.0, %v786
        %v788 = vmul.f32 %v785, %v787
        %v789 = vadd.f32 %v785, %v788
        %vm790 = vweird.f32 %v707
        %vm791 = vweird.f32 %v785
        %vm792 = vmor %vm790, %vm791
        %v793 = vsel %vm792, %v785, %v789
        %v794 = vand.u32 2147483647, %v707
        %vm795 = vcmp.eq.f32.partialorder %v794, 8.507059e+37
        %v796 = vand.u32 %v707, 2147483648
        %v797 = vor.u32 1.1754944e-38, %v796
        %v798 = vsel %vm795, %v797, %v793
        %v799 = vmul.f32 1.0, %v798
        %v800 = vrcp.pop %v708
        %v801 = vmul.f32 %v708, %v800
        %v802 = vsub.f32 1.0, %v801
        %v803 = vmul.f32 %v800, %v802
        %v804 = vadd.f32 %v800, %v803
        %vm805 = vweird.f32 %v708
        %vm806 = vweird.f32 %v800
        %vm807 = vmor %vm805, %vm806
        %v808 = vsel %vm807, %v800, %v804
        %v809 = vand.u32 2147483647, %v708
        %vm810 = vcmp.eq.f32.partialorder %v809, 8.507059e+37
        %v811 = vand.u32 %v708, 2147483648
        %v812 = vor.u32 1.1754944e-38, %v811
        %v813 = vsel %vm810, %v812, %v808
        %v814 = vmul.f32 1.0, %v813
        %v815 = vrcp.pop %v709
        %v816 = vmul.f32 %v709, %v815
        %v817 = vsub.f32 1.0, %v816
        %v818 = vmul.f32 %v815, %v817
        %v819 = vadd.f32 %v815, %v818
        %vm820 = vweird.f32 %v709
        %vm821 = vweird.f32 %v815
        %vm822 = vmor %vm820, %vm821
        %v823 = vsel %vm822, %v815, %v819
        %v824 = vand.u32 2147483647, %v709
        %vm825 = vcmp.eq.f32.partialorder %v824, 8.507059e+37
        %v826 = vand.u32 %v709, 2147483648
        %v827 = vor.u32 1.1754944e-38, %v826
        %v828 = vsel %vm825, %v827, %v823
        %v829 = vmul.f32 1.0, %v828
        %v838 = vrot.slane %v739, 4
        %v839 = vrot.slane %v769, 4
        %v840 = vrot.slane %v799, 4
        %v841 = vrot.slane %v829, 4
        %v842 = vsel %vm232, %v724, %v838
        %v843 = vsel %vm232, %v754, %v839
        %v844 = vsel %vm232, %v784, %v840
        %v845 = vsel %vm232, %v814, %v841
        %v850 = vmul.f32 %v393, %v842
        %v851 = vmul.f32 %v394, %v843
        %v852 = vmul.f32 %v395, %v844
        %v853 = vmul.f32 %v396, %v845
        %854 = vst [vmem:[%s197] sm:$0xff] %v388
        %855 = vst [vmem:[%s197 + $0x20] sm:$0xff] %v389
        %856 = vst [vmem:[%s197 + $0x40] sm:$0xff] %v390
        %857 = vst [vmem:[%s197 + $0x60] sm:$0xff] %v391
        %s858 = scalar_lea.vmem %s197, 16 [#allocation7]
        %859 = vst [vmem:[%s858] sm:$0xff] %v850
        %860 = vst [vmem:[%s858 + $0x20] sm:$0xff] %v851
        %861 = vst [vmem:[%s858 + $0x40] sm:$0xff] %v852
        %862 = vst [vmem:[%s858 + $0x60] sm:$0xff] %v853
        %s863 = scalar_lea.vmem %s176, 64 [#allocation5]
        %v864 = vld [vmem:[%s863] sm:$0xff]
        %v865 = vld [vmem:[%s863 + $0x10] sm:$0xff]
        %v866 = vld [vmem:[%s863 + $0x20] sm:$0xff]
        %v867 = vld [vmem:[%s863 + $0x30] sm:$0xff]
        %872 = vst [vmem:[#allocation1] ss:$2 sm:$0xff] %v864
        %v873 = vld.sshfl [vmem:[#allocation1] sm:$0xff pattern:$0x75316420]
        %v874 = vld.sshfl [vmem:[#allocation1 + $0x8] sm:$0xff pattern:$0x75316420]
        %s875 = scalar_lea.vmem [#allocation1], 16
        %876 = vst [vmem:[%s875] ss:$2 sm:$0xff] %v865
        %v877 = vld.sshfl [vmem:[#allocation1 + $0x10] sm:$0xff pattern:$0x75316420]
        %v878 = vld.sshfl [vmem:[#allocation1 + $0x18] sm:$0xff pattern:$0x75316420]
        %s879 = scalar_lea.vmem [#allocation1], 32
        %880 = vst [vmem:[%s879] ss:$2 sm:$0xff] %v866
        %v881 = vld.sshfl [vmem:[#allocation1 + $0x20] sm:$0xff pattern:$0x75316420]
        %v882 = vld.sshfl [vmem:[#allocation1 + $0x28] sm:$0xff pattern:$0x75316420]
        %s883 = scalar_lea.vmem [#allocation1], 48
        %884 = vst [vmem:[%s883] ss:$2 sm:$0xff] %v867
        %v885 = vld.sshfl [vmem:[#allocation1 + $0x30] sm:$0xff pattern:$0x75316420]
        %v886 = vld.sshfl [vmem:[#allocation1 + $0x38] sm:$0xff pattern:$0x75316420]
        %v895 = vsel %vm232, %v873, 0.0
        %v896 = vsel %vm232, %v874, 0.0
        %v897 = vadd.f32 %v895, %v896
        %898 = vadd.xlane.f32.xlu0 %v897
        %v899 = vpop.xlane.xlu0 %898
        %v900 = vsel %vm232, %v877, 0.0
        %v901 = vsel %vm232, %v878, 0.0
        %v902 = vadd.f32 %v900, %v901
        %903 = vadd.xlane.f32.xlu0 %v902
        %v904 = vpop.xlane.xlu0 %903
        %v905 = vsel %vm232, %v881, 0.0
        %v906 = vsel %vm232, %v882, 0.0
        %v907 = vadd.f32 %v905, %v906
        %908 = vadd.xlane.f32.xlu0 %v907
        %v909 = vpop.xlane.xlu0 %908
        %v910 = vsel %vm232, %v885, 0.0
        %v911 = vsel %vm232, %v886, 0.0
        %v912 = vadd.f32 %v910, %v911
        %913 = vadd.xlane.f32.xlu0 %v912
        %v914 = vpop.xlane.xlu0 %913
        %v915 = vmul.f32 %v899, %v259
        %v916 = vmul.f32 %v904, %v259
        %v917 = vmul.f32 %v909, %v259
        %v918 = vmul.f32 %v914, %v259
        %v919 = vmul.f32 %v200, %v915
        %v920 = vmul.f32 %v200, %v916
        %v921 = vmul.f32 %v200, %v917
        %v922 = vmul.f32 %v200, %v918
        %v923 = vadd.f32 %v919, %v270
        %v924 = vadd.f32 %v920, %v270
        %v925 = vadd.f32 %v921, %v270
        %v926 = vadd.f32 %v922, %v270
        %v927 = vxor.u32 %v923, 2147483648
        %v928 = vxor.u32 %v924, 2147483648
        %v929 = vxor.u32 %v925, 2147483648
        %v930 = vxor.u32 %v926, 2147483648
        %v931 = vmul.f32 %v927, 1.442695
        %v932 = vpow.pop %v931
        %v933 = vmul.f32 %v928, 1.442695
        %v934 = vpow.pop %v933
        %v935 = vmul.f32 %v929, 1.442695
        %v936 = vpow.pop %v935
        %v937 = vmul.f32 %v930, 1.442695
        %v938 = vpow.pop %v937
        %v939 = vadd.f32 %v932, 1.0
        %v940 = vadd.f32 %v934, 1.0
        %v941 = vadd.f32 %v936, 1.0
        %v942 = vadd.f32 %v938, 1.0
        %v943 = vrcp.pop %v939
        %v944 = vmul.f32 %v939, %v943
        %v945 = vsub.f32 1.0, %v944
        %v946 = vmul.f32 %v943, %v945
        %v947 = vadd.f32 %v943, %v946
        %vm948 = vweird.f32 %v939
        %vm949 = vweird.f32 %v943
        %vm950 = vmor %vm948, %vm949
        %v951 = vsel %vm950, %v943, %v947
        %v952 = vand.u32 2147483647, %v939
        %vm953 = vcmp.eq.f32.partialorder %v952, 8.507059e+37
        %v954 = vand.u32 %v939, 2147483648
        %v955 = vor.u32 1.1754944e-38, %v954
        %v956 = vsel %vm953, %v955, %v951
        %v957 = vmul.f32 1.0, %v956
        %v958 = vrcp.pop %v940
        %v959 = vmul.f32 %v940, %v958
        %v960 = vsub.f32 1.0, %v959
        %v961 = vmul.f32 %v958, %v960
        %v962 = vadd.f32 %v958, %v961
        %vm963 = vweird.f32 %v940
        %vm964 = vweird.f32 %v958
        %vm965 = vmor %vm963, %vm964
        %v966 = vsel %vm965, %v958, %v962
        %v967 = vand.u32 2147483647, %v940
        %vm968 = vcmp.eq.f32.partialorder %v967, 8.507059e+37
        %v969 = vand.u32 %v940, 2147483648
        %v970 = vor.u32 1.1754944e-38, %v969
        %v971 = vsel %vm968, %v970, %v966
        %v972 = vmul.f32 1.0, %v971
        %v973 = vrcp.pop %v941
        %v974 = vmul.f32 %v941, %v973
        %v975 = vsub.f32 1.0, %v974
        %v976 = vmul.f32 %v973, %v975
        %v977 = vadd.f32 %v973, %v976
        %vm978 = vweird.f32 %v941
        %vm979 = vweird.f32 %v973
        %vm980 = vmor %vm978, %vm979
        %v981 = vsel %vm980, %v973, %v977
        %v982 = vand.u32 2147483647, %v941
        %vm983 = vcmp.eq.f32.partialorder %v982, 8.507059e+37
        %v984 = vand.u32 %v941, 2147483648
        %v985 = vor.u32 1.1754944e-38, %v984
        %v986 = vsel %vm983, %v985, %v981
        %v987 = vmul.f32 1.0, %v986
        %v988 = vrcp.pop %v942
        %v989 = vmul.f32 %v942, %v988
        %v990 = vsub.f32 1.0, %v989
        %v991 = vmul.f32 %v988, %v990
        %v992 = vadd.f32 %v988, %v991
        %vm993 = vweird.f32 %v942
        %vm994 = vweird.f32 %v988
        %vm995 = vmor %vm993, %vm994
        %v996 = vsel %vm995, %v988, %v992
        %v997 = vand.u32 2147483647, %v942
        %vm998 = vcmp.eq.f32.partialorder %v997, 8.507059e+37
        %v999 = vand.u32 %v942, 2147483648
        %v1000 = vor.u32 1.1754944e-38, %v999
        %v1001 = vsel %vm998, %v1000, %v996
        %v1002 = vmul.f32 1.0, %v1001
        %1004 = vset.pattern.permute.xlu0 0
        %1005 = vperm.xlu0 %1004, %v957
        %v1006 = vpop.permute.xlu0 %1005
        %1008 = vset.pattern.permute.xlu0 0
        %1009 = vperm.xlu0 %1008, %v972
        %v1010 = vpop.permute.xlu0 %1009
        %1012 = vset.pattern.permute.xlu0 0
        %1013 = vperm.xlu0 %1012, %v987
        %v1014 = vpop.permute.xlu0 %1013
        %1016 = vset.pattern.permute.xlu0 0
        %1017 = vperm.xlu0 %1016, %v1002
        %v1018 = vpop.permute.xlu0 %1017
        %v1020 = vunpack.c.l.s4 839922192
        %v1021 = vunpack.c.0.s8 %v1020
        %v1022 = vperm.slane %v1006, %v1021
        %v1024 = vunpack.c.l.s4 839922192
        %v1025 = vunpack.c.0.s8 %v1024
        %v1026 = vperm.slane %v1010, %v1025
        %v1028 = vunpack.c.l.s4 839922192
        %v1029 = vunpack.c.0.s8 %v1028
        %v1030 = vperm.slane %v1014, %v1029
        %v1032 = vunpack.c.l.s4 839922192
        %v1033 = vunpack.c.0.s8 %v1032
        %v1034 = vperm.slane %v1018, %v1033
        %v1039 = vmul.f32 %v864, %v1022
        %v1040 = vmul.f32 %v865, %v1026
        %v1041 = vmul.f32 %v866, %v1030
        %v1042 = vmul.f32 %v867, %v1034
        %s1043 = scalar_lea.vmem %s176, 72 [#allocation5]
        %v1044 = vld [vmem:[%s1043] sm:$0xff]
        %v1045 = vld [vmem:[%s1043 + $0x10] sm:$0xff]
        %v1046 = vld [vmem:[%s1043 + $0x20] sm:$0xff]
        %v1047 = vld [vmem:[%s1043 + $0x30] sm:$0xff]
        %1052 = vst [vmem:[#allocation1] ss:$2 sm:$0xff] %v1044
        %v1053 = vld.sshfl [vmem:[#allocation1] sm:$0xff pattern:$0x75316420]
        %v1054 = vld.sshfl [vmem:[#allocation1 + $0x8] sm:$0xff pattern:$0x75316420]
        %s1055 = scalar_lea.vmem [#allocation1], 16
        %1056 = vst [vmem:[%s1055] ss:$2 sm:$0xff] %v1045
        %v1057 = vld.sshfl [vmem:[#allocation1 + $0x10] sm:$0xff pattern:$0x75316420]
        %v1058 = vld.sshfl [vmem:[#allocation1 + $0x18] sm:$0xff pattern:$0x75316420]
        %s1059 = scalar_lea.vmem [#allocation1], 32
        %1060 = vst [vmem:[%s1059] ss:$2 sm:$0xff] %v1046
        %v1061 = vld.sshfl [vmem:[#allocation1 + $0x20] sm:$0xff pattern:$0x75316420]
        %v1062 = vld.sshfl [vmem:[#allocation1 + $0x28] sm:$0xff pattern:$0x75316420]
        %s1063 = scalar_lea.vmem [#allocation1], 48
        %1064 = vst [vmem:[%s1063] ss:$2 sm:$0xff] %v1047
        %v1065 = vld.sshfl [vmem:[#allocation1 + $0x30] sm:$0xff pattern:$0x75316420]
        %v1066 = vld.sshfl [vmem:[#allocation1 + $0x38] sm:$0xff pattern:$0x75316420]
        %v1075 = vsel %vm232, %v1053, 0.0
        %v1076 = vsel %vm232, %v1054, 0.0
        %v1077 = vadd.f32 %v1075, %v1076
        %1078 = vadd.xlane.f32.xlu0 %v1077
        %v1079 = vpop.xlane.xlu0 %1078
        %v1080 = vsel %vm232, %v1057, 0.0
        %v1081 = vsel %vm232, %v1058, 0.0
        %v1082 = vadd.f32 %v1080, %v1081
        %1083 = vadd.xlane.f32.xlu0 %v1082
        %v1084 = vpop.xlane.xlu0 %1083
        %v1085 = vsel %vm232, %v1061, 0.0
        %v1086 = vsel %vm232, %v1062, 0.0
        %v1087 = vadd.f32 %v1085, %v1086
        %1088 = vadd.xlane.f32.xlu0 %v1087
        %v1089 = vpop.xlane.xlu0 %1088
        %v1090 = vsel %vm232, %v1065, 0.0
        %v1091 = vsel %vm232, %v1066, 0.0
        %v1092 = vadd.f32 %v1090, %v1091
        %1093 = vadd.xlane.f32.xlu0 %v1092
        %v1094 = vpop.xlane.xlu0 %1093
        %v1095 = vmul.f32 %v1079, %v259
        %v1096 = vmul.f32 %v1084, %v259
        %v1097 = vmul.f32 %v1089, %v259
        %v1098 = vmul.f32 %v1094, %v259
        %v1104 = vunpack.c.l.s4 839922192
        %v1105 = vunpack.c.0.s8 %v1104
        %v1106 = vperm.slane %v1095, %v1105
        %v1108 = vunpack.c.l.s4 839922192
        %v1109 = vunpack.c.0.s8 %v1108
        %v1110 = vperm.slane %v1096, %v1109
        %v1112 = vunpack.c.l.s4 839922192
        %v1113 = vunpack.c.0.s8 %v1112
        %v1114 = vperm.slane %v1097, %v1113
        %v1116 = vunpack.c.l.s4 839922192
        %v1117 = vunpack.c.0.s8 %v1116
        %v1118 = vperm.slane %v1098, %v1117
        %v1123 = vsub.f32 %v1044, %v1106
        %v1124 = vsub.f32 %v1045, %v1110
        %v1125 = vsub.f32 %v1046, %v1114
        %v1126 = vsub.f32 %v1047, %v1118
        %v1127 = vmul.f32 %v1123, %v1123
        %v1128 = vmul.f32 %v1124, %v1124
        %v1129 = vmul.f32 %v1125, %v1125
        %v1130 = vmul.f32 %v1126, %v1126
        %1135 = vst [vmem:[#allocation1] ss:$2 sm:$0xff] %v1127
        %v1136 = vld.sshfl [vmem:[#allocation1] sm:$0xff pattern:$0x75316420]
        %v1137 = vld.sshfl [vmem:[#allocation1 + $0x8] sm:$0xff pattern:$0x75316420]
        %s1138 = scalar_lea.vmem [#allocation1], 16
        %1139 = vst [vmem:[%s1138] ss:$2 sm:$0xff] %v1128
        %v1140 = vld.sshfl [vmem:[#allocation1 + $0x10] sm:$0xff pattern:$0x75316420]
        %v1141 = vld.sshfl [vmem:[#allocation1 + $0x18] sm:$0xff pattern:$0x75316420]
        %s1142 = scalar_lea.vmem [#allocation1], 32
        %1143 = vst [vmem:[%s1142] ss:$2 sm:$0xff] %v1129
        %v1144 = vld.sshfl [vmem:[#allocation1 + $0x20] sm:$0xff pattern:$0x75316420]
        %v1145 = vld.sshfl [vmem:[#allocation1 + $0x28] sm:$0xff pattern:$0x75316420]
        %s1146 = scalar_lea.vmem [#allocation1], 48
        %1147 = vst [vmem:[%s1146] ss:$2 sm:$0xff] %v1130
        %v1148 = vld.sshfl [vmem:[#allocation1 + $0x30] sm:$0xff pattern:$0x75316420]
        %v1149 = vld.sshfl [vmem:[#allocation1 + $0x38] sm:$0xff pattern:$0x75316420]
        %v1158 = vsel %vm232, %v1136, 0.0
        %v1159 = vsel %vm232, %v1137, 0.0
        %v1160 = vadd.f32 %v1158, %v1159
        %1161 = vadd.xlane.f32.xlu0 %v1160
        %v1162 = vpop.xlane.xlu0 %1161
        %v1163 = vsel %vm232, %v1140, 0.0
        %v1164 = vsel %vm232, %v1141, 0.0
        %v1165 = vadd.f32 %v1163, %v1164
        %1166 = vadd.xlane.f32.xlu0 %v1165
        %v1167 = vpop.xlane.xlu0 %1166
        %v1168 = vsel %vm232, %v1144, 0.0
        %v1169 = vsel %vm232, %v1145, 0.0
        %v1170 = vadd.f32 %v1168, %v1169
        %1171 = vadd.xlane.f32.xlu0 %v1170
        %v1172 = vpop.xlane.xlu0 %1171
        %v1173 = vsel %vm232, %v1148, 0.0
        %v1174 = vsel %vm232, %v1149, 0.0
        %v1175 = vadd.f32 %v1173, %v1174
        %1176 = vadd.xlane.f32.xlu0 %v1175
        %v1177 = vpop.xlane.xlu0 %1176
        %v1178 = vmul.f32 %v1162, %v259
        %v1179 = vmul.f32 %v1167, %v259
        %v1180 = vmul.f32 %v1172, %v259
        %v1181 = vmul.f32 %v1177, %v259
        %v1182 = vadd.f32 %v1178, 1e-05
        %v1183 = vadd.f32 %v1179, 1e-05
        %v1184 = vadd.f32 %v1180, 1e-05
        %v1185 = vadd.f32 %v1181, 1e-05
        %v1186 = vrsqrt.pop %v1182
        %v1187 = vmul.f32 %v1186, %v1182
        %v1188 = vmul.f32 %v1187, %v1186
        %v1189 = vmul.f32 0.5, %v1188
        %v1190 = vsub.f32 1.5, %v1189
        %v1191 = vmul.f32 %v1186, %v1190
        %vm1192 = vweird.f32 %v1182
        %vm1193 = vweird.f32 %v1186
        %vm1194 = vmor %vm1192, %vm1193
        %v1195 = vsel %vm1194, %v1186, %v1191
        %v1196 = vrsqrt.pop %v1183
        %v1197 = vmul.f32 %v1196, %v1183
        %v1198 = vmul.f32 %v1197, %v1196
        %v1199 = vmul.f32 0.5, %v1198
        %v1200 = vsub.f32 1.5, %v1199
        %v1201 = vmul.f32 %v1196, %v1200
        %vm1202 = vweird.f32 %v1183
        %vm1203 = vweird.f32 %v1196
        %vm1204 = vmor %vm1202, %vm1203
        %v1205 = vsel %vm1204, %v1196, %v1201
        %v1206 = vrsqrt.pop %v1184
        %v1207 = vmul.f32 %v1206, %v1184
        %v1208 = vmul.f32 %v1207, %v1206
        %v1209 = vmul.f32 0.5, %v1208
        %v1210 = vsub.f32 1.5, %v1209
        %v1211 = vmul.f32 %v1206, %v1210
        %vm1212 = vweird.f32 %v1184
        %vm1213 = vweird.f32 %v1206
        %vm1214 = vmor %vm1212, %vm1213
        %v1215 = vsel %vm1214, %v1206, %v1211
        %v1216 = vrsqrt.pop %v1185
        %v1217 = vmul.f32 %v1216, %v1185
        %v1218 = vmul.f32 %v1217, %v1216
        %v1219 = vmul.f32 0.5, %v1218
        %v1220 = vsub.f32 1.5, %v1219
        %v1221 = vmul.f32 %v1216, %v1220
        %vm1222 = vweird.f32 %v1185
        %vm1223 = vweird.f32 %v1216
        %vm1224 = vmor %vm1222, %vm1223
        %v1225 = vsel %vm1224, %v1216, %v1221
        %v1231 = vunpack.c.l.s4 839922192
        %v1232 = vunpack.c.0.s8 %v1231
        %v1233 = vperm.slane %v1195, %v1232
        %v1235 = vunpack.c.l.s4 839922192
        %v1236 = vunpack.c.0.s8 %v1235
        %v1237 = vperm.slane %v1205, %v1236
        %v1239 = vunpack.c.l.s4 839922192
        %v1240 = vunpack.c.0.s8 %v1239
        %v1241 = vperm.slane %v1215, %v1240
        %v1243 = vunpack.c.l.s4 839922192
        %v1244 = vunpack.c.0.s8 %v1243
        %v1245 = vperm.slane %v1225, %v1244
        %v1250 = vmul.f32 %v1123, %v1233
        %v1251 = vmul.f32 %v1124, %v1237
        %v1252 = vmul.f32 %v1125, %v1241
        %v1253 = vmul.f32 %v1126, %v1245
        %v1254 = vmul.f32 %v1250, %v609
        %v1255 = vmul.f32 %v1251, %v609
        %v1256 = vmul.f32 %v1252, %v609
        %v1257 = vmul.f32 %v1253, %v609
        %v1258 = vadd.f32 %v1254, %v621
        %v1259 = vadd.f32 %v1255, %v621
        %v1260 = vadd.f32 %v1256, %v621
        %v1261 = vadd.f32 %v1257, %v621
        %1266 = vst [vmem:[#allocation1] ss:$2 sm:$0xff] %v1258
        %v1267 = vld.sshfl [vmem:[#allocation1] sm:$0xff pattern:$0x75316420]
        %v1268 = vld.sshfl [vmem:[#allocation1 + $0x8] sm:$0xff pattern:$0x75316420]
        %s1269 = scalar_lea.vmem [#allocation1], 16
        %1270 = vst [vmem:[%s1269] ss:$2 sm:$0xff] %v1259
        %v1271 = vld.sshfl [vmem:[#allocation1 + $0x10] sm:$0xff pattern:$0x75316420]
        %v1272 = vld.sshfl [vmem:[#allocation1 + $0x18] sm:$0xff pattern:$0x75316420]
        %s1273 = scalar_lea.vmem [#allocation1], 32
        %1274 = vst [vmem:[%s1273] ss:$2 sm:$0xff] %v1260
        %v1275 = vld.sshfl [vmem:[#allocation1 + $0x20] sm:$0xff pattern:$0x75316420]
        %v1276 = vld.sshfl [vmem:[#allocation1 + $0x28] sm:$0xff pattern:$0x75316420]
        %s1277 = scalar_lea.vmem [#allocation1], 48
        %1278 = vst [vmem:[%s1277] ss:$2 sm:$0xff] %v1261
        %v1279 = vld.sshfl [vmem:[#allocation1 + $0x30] sm:$0xff pattern:$0x75316420]
        %v1280 = vld.sshfl [vmem:[#allocation1 + $0x38] sm:$0xff pattern:$0x75316420]
        %v1289 = vmul.f32 %v629, %v1267
        %v1290 = vmul.f32 %v629, %v1268
        %v1291 = vmul.f32 %v629, %v1271
        %v1292 = vmul.f32 %v629, %v1272
        %v1293 = vmul.f32 %v629, %v1275
        %v1294 = vmul.f32 %v629, %v1276
        %v1295 = vmul.f32 %v629, %v1279
        %v1296 = vmul.f32 %v629, %v1280
        %v1297 = vadd.f32 %v1289, %v668
        %v1298 = vadd.f32 %v1290, %v668
        %v1299 = vadd.f32 %v1291, %v668
        %v1300 = vadd.f32 %v1292, %v668
        %v1301 = vadd.f32 %v1293, %v668
        %v1302 = vadd.f32 %v1294, %v668
        %v1303 = vadd.f32 %v1295, %v668
        %v1304 = vadd.f32 %v1296, %v668
        %v1305 = vxor.u32 %v1297, 2147483648
        %v1306 = vxor.u32 %v1298, 2147483648
        %v1307 = vxor.u32 %v1299, 2147483648
        %v1308 = vxor.u32 %v1300, 2147483648
        %v1309 = vxor.u32 %v1301, 2147483648
        %v1310 = vxor.u32 %v1302, 2147483648
        %v1311 = vxor.u32 %v1303, 2147483648
        %v1312 = vxor.u32 %v1304, 2147483648
        %v1313 = vmul.f32 %v1305, 1.442695
        %v1314 = vpow.pop %v1313
        %v1315 = vmul.f32 %v1306, 1.442695
        %v1316 = vpow.pop %v1315
        %v1317 = vmul.f32 %v1307, 1.442695
        %v1318 = vpow.pop %v1317
        %v1319 = vmul.f32 %v1308, 1.442695
        %v1320 = vpow.pop %v1319
        %v1321 = vmul.f32 %v1309, 1.442695
        %v1322 = vpow.pop %v1321
        %v1323 = vmul.f32 %v1310, 1.442695
        %v1324 = vpow.pop %v1323
        %v1325 = vmul.f32 %v1311, 1.442695
        %v1326 = vpow.pop %v1325
        %v1327 = vmul.f32 %v1312, 1.442695
        %v1328 = vpow.pop %v1327
        %v1329 = vadd.f32 %v1314, 1.0
        %v1330 = vadd.f32 %v1316, 1.0
        %v1331 = vadd.f32 %v1318, 1.0
        %v1332 = vadd.f32 %v1320, 1.0
        %v1333 = vadd.f32 %v1322, 1.0
        %v1334 = vadd.f32 %v1324, 1.0
        %v1335 = vadd.f32 %v1326, 1.0
        %v1336 = vadd.f32 %v1328, 1.0
        %v1337 = vrcp.pop %v1329
        %v1338 = vmul.f32 %v1329, %v1337
        %v1339 = vsub.f32 1.0, %v1338
        %v1340 = vmul.f32 %v1337, %v1339
        %v1341 = vadd.f32 %v1337, %v1340
        %vm1342 = vweird.f32 %v1329
        %vm1343 = vweird.f32 %v1337
        %vm1344 = vmor %vm1342, %vm1343
        %v1345 = vsel %vm1344, %v1337, %v1341
        %v1346 = vand.u32 2147483647, %v1329
        %vm1347 = vcmp.eq.f32.partialorder %v1346, 8.507059e+37
        %v1348 = vand.u32 %v1329, 2147483648
        %v1349 = vor.u32 1.1754944e-38, %v1348
        %v1350 = vsel %vm1347, %v1349, %v1345
        %v1351 = vmul.f32 1.0, %v1350
        %v1352 = vrcp.pop %v1330
        %v1353 = vmul.f32 %v1330, %v1352
        %v1354 = vsub.f32 1.0, %v1353
        %v1355 = vmul.f32 %v1352, %v1354
        %v1356 = vadd.f32 %v1352, %v1355
        %vm1357 = vweird.f32 %v1330
        %vm1358 = vweird.f32 %v1352
        %vm1359 = vmor %vm1357, %vm1358
        %v1360 = vsel %vm1359, %v1352, %v1356
        %v1361 = vand.u32 2147483647, %v1330
        %vm1362 = vcmp.eq.f32.partialorder %v1361, 8.507059e+37
        %v1363 = vand.u32 %v1330, 2147483648
        %v1364 = vor.u32 1.1754944e-38, %v1363
        %v1365 = vsel %vm1362, %v1364, %v1360
        %v1366 = vmul.f32 1.0, %v1365
        %v1367 = vrcp.pop %v1331
        %v1368 = vmul.f32 %v1331, %v1367
        %v1369 = vsub.f32 1.0, %v1368
        %v1370 = vmul.f32 %v1367, %v1369
        %v1371 = vadd.f32 %v1367, %v1370
        %vm1372 = vweird.f32 %v1331
        %vm1373 = vweird.f32 %v1367
        %vm1374 = vmor %vm1372, %vm1373
        %v1375 = vsel %vm1374, %v1367, %v1371
        %v1376 = vand.u32 2147483647, %v1331
        %vm1377 = vcmp.eq.f32.partialorder %v1376, 8.507059e+37
        %v1378 = vand.u32 %v1331, 2147483648
        %v1379 = vor.u32 1.1754944e-38, %v1378
        %v1380 = vsel %vm1377, %v1379, %v1375
        %v1381 = vmul.f32 1.0, %v1380
        %v1382 = vrcp.pop %v1332
        %v1383 = vmul.f32 %v1332, %v1382
        %v1384 = vsub.f32 1.0, %v1383
        %v1385 = vmul.f32 %v1382, %v1384
        %v1386 = vadd.f32 %v1382, %v1385
        %vm1387 = vweird.f32 %v1332
        %vm1388 = vweird.f32 %v1382
        %vm1389 = vmor %vm1387, %vm1388
        %v1390 = vsel %vm1389, %v1382, %v1386
        %v1391 = vand.u32 2147483647, %v1332
        %vm1392 = vcmp.eq.f32.partialorder %v1391, 8.507059e+37
        %v1393 = vand.u32 %v1332, 2147483648
        %v1394 = vor.u32 1.1754944e-38, %v1393
        %v1395 = vsel %vm1392, %v1394, %v1390
        %v1396 = vmul.f32 1.0, %v1395
        %v1397 = vrcp.pop %v1333
        %v1398 = vmul.f32 %v1333, %v1397
        %v1399 = vsub.f32 1.0, %v1398
        %v1400 = vmul.f32 %v1397, %v1399
        %v1401 = vadd.f32 %v1397, %v1400
        %vm1402 = vweird.f32 %v1333
        %vm1403 = vweird.f32 %v1397
        %vm1404 = vmor %vm1402, %vm1403
        %v1405 = vsel %vm1404, %v1397, %v1401
        %v1406 = vand.u32 2147483647, %v1333
        %vm1407 = vcmp.eq.f32.partialorder %v1406, 8.507059e+37
        %v1408 = vand.u32 %v1333, 2147483648
        %v1409 = vor.u32 1.1754944e-38, %v1408
        %v1410 = vsel %vm1407, %v1409, %v1405
        %v1411 = vmul.f32 1.0, %v1410
        %v1412 = vrcp.pop %v1334
        %v1413 = vmul.f32 %v1334, %v1412
        %v1414 = vsub.f32 1.0, %v1413
        %v1415 = vmul.f32 %v1412, %v1414
        %v1416 = vadd.f32 %v1412, %v1415
        %vm1417 = vweird.f32 %v1334
        %vm1418 = vweird.f32 %v1412
        %vm1419 = vmor %vm1417, %vm1418
        %v1420 = vsel %vm1419, %v1412, %v1416
        %v1421 = vand.u32 2147483647, %v1334
        %vm1422 = vcmp.eq.f32.partialorder %v1421, 8.507059e+37
        %v1423 = vand.u32 %v1334, 2147483648
        %v1424 = vor.u32 1.1754944e-38, %v1423
        %v1425 = vsel %vm1422, %v1424, %v1420
        %v1426 = vmul.f32 1.0, %v1425
        %v1427 = vrcp.pop %v1335
        %v1428 = vmul.f32 %v1335, %v1427
        %v1429 = vsub.f32 1.0, %v1428
        %v1430 = vmul.f32 %v1427, %v1429
        %v1431 = vadd.f32 %v1427, %v1430
        %vm1432 = vweird.f32 %v1335
        %vm1433 = vweird.f32 %v1427
        %vm1434 = vmor %vm1432, %vm1433
        %v1435 = vsel %vm1434, %v1427, %v1431
        %v1436 = vand.u32 2147483647, %v1335
        %vm1437 = vcmp.eq.f32.partialorder %v1436, 8.507059e+37
        %v1438 = vand.u32 %v1335, 2147483648
        %v1439 = vor.u32 1.1754944e-38, %v1438
        %v1440 = vsel %vm1437, %v1439, %v1435
        %v1441 = vmul.f32 1.0, %v1440
        %v1442 = vrcp.pop %v1336
        %v1443 = vmul.f32 %v1336, %v1442
        %v1444 = vsub.f32 1.0, %v1443
        %v1445 = vmul.f32 %v1442, %v1444
        %v1446 = vadd.f32 %v1442, %v1445
        %vm1447 = vweird.f32 %v1336
        %vm1448 = vweird.f32 %v1442
        %vm1449 = vmor %vm1447, %vm1448
        %v1450 = vsel %vm1449, %v1442, %v1446
        %v1451 = vand.u32 2147483647, %v1336
        %vm1452 = vcmp.eq.f32.partialorder %v1451, 8.507059e+37
        %v1453 = vand.u32 %v1336, 2147483648
        %v1454 = vor.u32 1.1754944e-38, %v1453
        %v1455 = vsel %vm1452, %v1454, %v1450
        %v1456 = vmul.f32 1.0, %v1455
        %v1465 = vrot.slane %v1366, 4
        %v1466 = vrot.slane %v1396, 4
        %v1467 = vrot.slane %v1426, 4
        %v1468 = vrot.slane %v1456, 4
        %v1469 = vsel %vm232, %v1351, %v1465
        %v1470 = vsel %vm232, %v1381, %v1466
        %v1471 = vsel %vm232, %v1411, %v1467
        %v1472 = vsel %vm232, %v1441, %v1468
        %v1477 = vmul.f32 %v1044, %v1469
        %v1478 = vmul.f32 %v1045, %v1470
        %v1479 = vmul.f32 %v1046, %v1471
        %v1480 = vmul.f32 %v1047, %v1472
        %1481 = vst [vmem:[%s197 + $0x8] sm:$0xff] %v1039
        %1482 = vst [vmem:[%s197 + $0x28] sm:$0xff] %v1040
        %1483 = vst [vmem:[%s197 + $0x48] sm:$0xff] %v1041
        %1484 = vst [vmem:[%s197 + $0x68] sm:$0xff] %v1042
        %1485 = vst [vmem:[%s858 + $0x8] sm:$0xff] %v1477
        %1486 = vst [vmem:[%s858 + $0x28] sm:$0xff] %v1478
        %1487 = vst [vmem:[%s858 + $0x48] sm:$0xff] %v1479
        %1488 = vst [vmem:[%s858 + $0x68] sm:$0xff] %v1480
        %s1489 = sand.u32 %s91, 1
        %s1490 = scalar_lea.sflag [#allocation4], %s1489
        %s1491 = sand.u32 %s91, 1
        %s1492 = smul.addr %s1491, 128
        %s1493 = scalar_lea.vmem [#allocation7], %s1492
        // Predicated region
        $region37: #{tpu_custom_call.1} parent=27 // pred_check
          %p1494 = pneg %p101
        $region38: #{tpu_custom_call.1} parent=27 // pred_check_branch
          %1496 = sbr.rel (%p1494) target = $region40
        $region39: #{tpu_custom_call.1} parent=27 // pred_region
          %s1497 = smul.u32 4, %s25
          %1499 = vsyncadd %s1490, 0
          %s1500 = smul.addr %s1497, 8
          %s1501 = smul.addr %s24, 32
          %s1502 = sadd.s32 %s1500, %s1501
          %s1503 = smul.addr %s1502, 4
          %s1504 = scalar_lea.hbm %s2, %s1503
          %s1505 = sshll.u32 %s1493, 4
          %s1506 = int_to_ptr.vmem [resolvable:$true] %s1505
          %s1507 = sshll.u32 %s1504, 4
          %s1508 = int_to_ptr.hbm [resolvable:$true] %s1507
          %1513 = dma.vmem_to_hbm [thread:$0]  %s1506, 2048, %s1508, %s1490, 256, 256, 16
        $region40: #{tpu_custom_call.1} parent=27 // pred_fallthru
          _
      $region28: #{tpu_custom_call.1} parent=5 // pred_fallthru
        _
      %p1514 = scmp.le.s32.totalorder 2, %s15
      // Predicated region
      $region41: #{tpu_custom_call.1} parent=5 // pred_check
        %p1515 = pneg %p1514
      $region42: #{tpu_custom_call.1} parent=5 // pred_check_branch
        %1517 = sbr.rel (%p1515) target = $region44
      $region43: #{tpu_custom_call.1} parent=5 // pred_region
        %s1518 = ssub.s32 %s15, 2
        // Predicated region
        $region45: #{tpu_custom_call.1} parent=43 // pred_check
          %p1519 = pneg %p107
        $region46: #{tpu_custom_call.1} parent=43 // pred_check_branch
          %1521 = sbr.rel (%p1519) target = $region48
        $region47: #{tpu_custom_call.1} parent=43 // pred_region
          %s1522 = sand.u32 %s92, 1
          %s1523 = scalar_lea.sflag [#allocation4], %s1522
          %s1524 = sand.u32 %s92, 1
          %s1525 = smul.addr %s1524, 128
          %s1526 = scalar_lea.vmem [#allocation7], %s1525
          %1528 = dma.done %s1523, 2048
        $region48: #{tpu_custom_call.1} parent=43 // pred_fallthru
          _
      $region44: #{tpu_custom_call.1} parent=5 // pred_fallthru
        _
    $region6: #{tpu_custom_call.1} parent=1 // loop_footer
      %s19 = sadd.s32 1, %s15
    $region7: #{tpu_custom_call.1} parent=1 // loop_footer_branch
      %14 = sbr.rel target = $region3
    $region8: #{tpu_custom_call.1} parent=1 // loop_exit
      _
    %1529 = vsyncpa [#allocation3], 1
    %s1530 = scalar_lea.sflag [#allocation3], 1
    %1531 = vsyncpa %s1530, 1
    %1532 = vsyncpa [#allocation6], 1
    %s1533 = scalar_lea.sflag [#allocation6], 1
    %1534 = vsyncpa %s1533, 1
    %1535 = vsyncpa [#allocation4], 1
    %s1536 = scalar_lea.sflag [#allocation4], 1
    %1537 = vsyncpa %s1536, 1

</llo_original>
